<compile_context>
chip_gen: v6e
topology: v6e:2x2x1
jax: 0.10.0
libtpu: 0.0.40
codegen_flags: <defaults>
</compile_context>

<pallas_src>
import jax
import jax.numpy as jnp
from jax import lax
from jax.experimental import pallas as pl
from jax.experimental.pallas import tpu as pltpu


# --------------------------------------------------------------------------
# Pallas kernel: crop the whole (C, D, H, W) volume at offsets (k, i, j).
# --------------------------------------------------------------------------
def _crop3d_kernel(off_ref, x_hbm, o_ref, slab_ref, dma_sem):
    # off_ref : SMEM int32[3] = (k, i, j)            (scalar-prefetched)
    # x_hbm   : full (C, D, H, W) input, memory_space=pl.ANY (stays in HBM)
    # o_ref   : VMEM (C, td, th, tw) output block (full array)
    # slab_ref: VMEM (C, td, H, W) scratch slab
    # dma_sem : DMA completion semaphore
    k = off_ref[0]
    i = off_ref[1]
    j = off_ref[2]

    C, td, th, tw = o_ref.shape
    H = slab_ref.shape[2]
    W = slab_ref.shape[3]

    # One cropped DMA along depth: HBM (C, D, H, W) -> VMEM (C, td, H, W).
    # Only a leading (non-tiled) dim carries a dynamic offset.
    cp = pltpu.make_async_copy(x_hbm.at[:, pl.ds(k, td), :, :],
                               slab_ref, dma_sem)
    cp.start()

    # Rolling left by i == rolling right by (H - i) mod H: row i lands at 0.
    shift_h = lax.rem(H - i, H)
    shift_w = lax.rem(W - j, W)

    cp.wait()

    # TODO(synk): for large C*td switch to lax.fori_loop(..., unroll=True) to
    # bound live ranges; here C*td is tiny so a static unrolled loop is fine.
    for c in range(C):
        for d in range(td):
            plane = slab_ref[c, d]                               # (H, W)
            rows = pltpu.roll(plane, shift_h, axis=0)[:th, :]    # row i -> 0
            rows = pltpu.roll(rows, shift_w, axis=1)             # col j -> 0
            o_ref[c, d] = rows[:, :tw]


def crop3d_pallas(img, offsets, size):
    """img: (C, D, H, W); offsets: int32[3] = (k, i, j); size: (td, th, tw)."""
    td, th, tw = size
    C, D, H, W = img.shape
    if D < td or H < th or W < tw:
        raise ValueError("Required crop size larger than input image.")

    # Clamp externally supplied offsets so the DMA / ref reads stay in bounds.
    offsets = jnp.clip(
        offsets.astype(jnp.int32),
        jnp.zeros((3,), jnp.int32),
        jnp.array([D - td, H - th, W - tw], jnp.int32),
    )

    itemsize = jnp.dtype(img.dtype).itemsize
    slab_bytes = C * td * H * W * itemsize
    out_bytes = C * td * th * tw * itemsize
    vmem_limit = int(min(max(slab_bytes + 2 * out_bytes + (1 << 20),
                             16 * 1024 * 1024),
                         64 * 1024 * 1024))

    return pl.pallas_call(
        _crop3d_kernel,
        out_shape=jax.ShapeDtypeStruct((C, td, th, tw), img.dtype),
        grid_spec=pltpu.PrefetchScalarGridSpec(
            num_scalar_prefetch=1,
            grid=(1,),  # single fat step: one DMA covers all channels
            in_specs=[pl.BlockSpec(memory_space=pl.ANY)],
            out_specs=pl.BlockSpec((C, td, th, tw),
                                   lambda g, off: (0, 0, 0, 0)),
            scratch_shapes=[pltpu.VMEM((C, td, H, W), img.dtype),
                            pltpu.SemaphoreType.DMA],
        ),
        compiler_params=pltpu.CompilerParams(
            dimension_semantics=("arbitrary",),
            vmem_limit_bytes=vmem_limit),
        cost_estimate=pl.CostEstimate(flops=0, transcendentals=0,
                                      bytes_accessed=slab_bytes + out_bytes),
    )(offsets, img)


# --------------------------------------------------------------------------
# Module-equivalent wrapper (forward semantics of RandomCrop3D)
# --------------------------------------------------------------------------
def _setup_size(size):
    if isinstance(size, (int, float)):
        return (int(size), int(size), int(size))
    size = tuple(size)
    if len(size) == 1:
        return (size[0], size[0], size[0])
    assert len(size) == 3
    return size


def _pad_constant(img, padding, fill, padding_mode):
    if padding_mode != "constant":
        # TODO(synk): 'edge'/'reflect'/'symmetric' padding modes not ported.
        raise NotImplementedError("Only constant padding is ported.")
    if isinstance(padding, int):
        p = [padding] * 6
    else:
        padding = list(padding)
        if len(padding) == 1:
            p = [padding[0]] * 6
        elif len(padding) == 3:
            p = [padding[0], padding[0], padding[1],
                 padding[1], padding[2], padding[2]]
        elif len(padding) == 6:
            p = padding
        else:
            raise ValueError("Unsupported padding length: %d" % len(padding))
    # torch F.pad pairs apply from the last dim backwards:
    # (p[0], p[1]) -> W, (p[2], p[3]) -> H, (p[4], p[5]) -> D.
    pad_width = ([(0, 0)] * (img.ndim - 3)
                 + [(p[4], p[5]), (p[2], p[3]), (p[0], p[1])])
    return jnp.pad(img, pad_width, mode="constant", constant_values=fill)


class RandomCrop3D:
    """JAX/Pallas port of the PyTorch RandomCrop3D module (forward pass)."""

    def __init__(self, size, padding=None, pad_if_needed=False, fill=0,
                 padding_mode="constant"):
        self.size = _setup_size(size)              # (td, th, tw)
        self.padding = padding
        self.pad_if_needed = pad_if_needed
        self.fill = fill
        self.padding_mode = padding_mode

    def get_params(self, img, key):
        # Mirrors: d, w, h = [shape[-3], shape[-1], shape[-2]]
        d, w, h = img.shape[-3], img.shape[-1], img.shape[-2]
        td, th, tw = self.size
        if d + 1 < td or h + 1 < th or w + 1 < tw:
            raise ValueError("Required crop size larger than input image.")
        if d == td and w == tw and h == th:
            return jnp.zeros((3,), jnp.int32)
        if d < td or h < th or w < tw:
            # torch.randint(0, 0) raises on this edge case; mirror with a
            # well-defined error instead of producing garbage offsets.
            raise ValueError("Empty random-offset range for crop.")
        kk, ki, kj = jax.random.split(key, 3)
        k = jax.random.randint(kk, (), 0, d - td + 1, dtype=jnp.int32)
        i = jax.random.randint(ki, (), 0, h - th + 1, dtype=jnp.int32)
        j = jax.random.randint(kj, (), 0, w - tw + 1, dtype=jnp.int32)
        return jnp.stack([k, i, j])

    def forward(self, sample, key):
        img = sample["hr"]                         # (C, D, H, W)
        if self.padding is not None:
            img = _pad_constant(img, self.padding, self.fill,
                                self.padding_mode)
        if self.pad_if_needed:
            d_, w_, h_ = img.shape[-3], img.shape[-1], img.shape[-2]
            if d_ < self.size[0] or h_ < self.size[1] or w_ < self.size[2]:
                # TODO(synk): the reference pad_if_needed path builds a
                # 2-element padding list that its own pad() cannot consume;
                # not ported.
                raise NotImplementedError(
                    "pad_if_needed is not supported in the Pallas port.")
        offsets = self.get_params(img, key)
        cropped = crop3d_pallas(img, offsets, self.size)
        out = dict(sample)
        out["hr"] = cropped
        return out, offsets


# --------------------------------------------------------------------------
# Demo / self-check
# --------------------------------------------------------------------------
if __name__ == "__main__":
    key = jax.random.PRNGKey(0)
    k_img, k_crop = jax.random.split(key)

    C, D, H, W = 3, 10, 16, 256          # small, tile-friendly spatial extent
    img = jax.random.normal(k_img, (C, D, H, W), dtype=jnp.float32)
    sample = {"hr": img}

    module = RandomCrop3D(size=8)        # -> crop size (8, 8, 8)
    out_sample, offsets = module.forward(sample, k_crop)
    out = jax.block_until_ready(out_sample["hr"])

    # Pure-JAX reference of the same crop for verification.
    k, i, j = (int(offsets[0]), int(offsets[1]), int(offsets[2]))
    ref = img[:, k:k + 8, i:i + 8, j:j + 8]

    assert out.shape == (C, 8, 8, 8), out.shape
    assert out.dtype == img.dtype
    assert jnp.allclose(out, ref), "Pallas crop mismatch vs reference"

    print("KERNEL_OK")
</pallas_src>

<mosaic_0001>
module attributes {stable_mosaic.version = 11 : i64} {
  func.func @_crop3d_kernel(%arg0: i32, %arg1: memref<3xi32, #tpu.memory_space<smem>>, %arg2: memref<3x10x16x256xf32, #tpu.memory_space<any>>, %arg3: memref<3x8x8x8xf32, #tpu.memory_space<vmem>>, %arg4: memref<3x8x16x256xf32, #tpu.memory_space<vmem>>, %arg5: memref<!tpu.dma_semaphore, #tpu.memory_space<semaphore_mem>>) attributes {dimension_semantics = [#tpu.dimension_semantics<arbitrary>], iteration_bounds = array<i64: 1>, scalar_prefetch = 1 : i64, scratch_operands = 2 : i64, tpu.core_type = #tpu.core_type<tc>, window_params = [{}, {pipeline_mode = #tpu.pipeline_mode<synchronous>, transform_indices = @transform_1, window_bounds = array<i64: 3, 8, 8, 8>}]} {
    %c0 = arith.constant 0 : index
    %0 = memref.load %arg1[%c0] : memref<3xi32, #tpu.memory_space<smem>>
    %c1 = arith.constant 1 : index
    %1 = memref.load %arg1[%c1] : memref<3xi32, #tpu.memory_space<smem>>
    %c2 = arith.constant 2 : index
    %2 = memref.load %arg1[%c2] : memref<3xi32, #tpu.memory_space<smem>>
    %c0_i32 = arith.constant 0 : i32
    %c0_i32_0 = arith.constant 0 : i32
    %c0_i32_1 = arith.constant 0 : i32
    %3 = tpu.memref_slice %arg2[%c0_i32, %0, %c0_i32_0, %c0_i32_1] : memref<3x10x16x256xf32, #tpu.memory_space<any>> -> memref<3x8x16x256xf32, #tpu.memory_space<any>>
    tpu.enqueue_dma source(%3 : memref<3x8x16x256xf32, #tpu.memory_space<any>>) target(%arg4 : memref<3x8x16x256xf32, #tpu.memory_space<vmem>>) target_semaphore(%arg5 : memref<!tpu.dma_semaphore, #tpu.memory_space<semaphore_mem>>)
    %c16_i32 = arith.constant 16 : i32
    %4 = arith.subi %c16_i32, %1 : i32
    %c16_i32_2 = arith.constant 16 : i32
    %5 = arith.remsi %4, %c16_i32_2 : i32
    %c256_i32 = arith.constant 256 : i32
    %6 = arith.subi %c256_i32, %2 : i32
    %c256_i32_3 = arith.constant 256 : i32
    %7 = arith.remsi %6, %c256_i32_3 : i32
    %c0_i32_4 = arith.constant 0 : i32
    %c0_i32_5 = arith.constant 0 : i32
    %c0_i32_6 = arith.constant 0 : i32
    %8 = tpu.memref_slice %arg2[%c0_i32_4, %0, %c0_i32_5, %c0_i32_6] : memref<3x10x16x256xf32, #tpu.memory_space<any>> -> memref<3x8x16x256xf32, #tpu.memory_space<any>>
    tpu.wait_dma2 semaphore(%arg5 : memref<!tpu.dma_semaphore, #tpu.memory_space<semaphore_mem>>) src(%8 : memref<3x8x16x256xf32, #tpu.memory_space<any>>) dst(%arg4 : memref<3x8x16x256xf32, #tpu.memory_space<vmem>>)
    %c0_7 = arith.constant 0 : index
    %c0_8 = arith.constant 0 : index
    %c0_9 = arith.constant 0 : index
    %c0_10 = arith.constant 0 : index
    %9 = vector.load %arg4[%c0_7, %c0_8, %c0_9, %c0_10] : memref<3x8x16x256xf32, #tpu.memory_space<vmem>>, vector<1x1x16x256xf32>
    %10 = vector.shape_cast %9 : vector<1x1x16x256xf32> to vector<16x256xf32>
    %11 = tpu.dynamic_rotate %10 by %5 dim 0 : vector<16x256xf32>, i32 -> vector<16x256xf32>
    %12 = vector.extract_strided_slice %11 {offsets = [0, 0], sizes = [8, 256], strides = [1, 1]} : vector<16x256xf32> to vector<8x256xf32>
    %13 = tpu.dynamic_rotate %12 by %7 dim 1 : vector<8x256xf32>, i32 -> vector<8x256xf32>
    %14 = vector.extract_strided_slice %13 {offsets = [0, 0], sizes = [8, 8], strides = [1, 1]} : vector<8x256xf32> to vector<8x8xf32>
    %c0_11 = arith.constant 0 : index
    %c0_12 = arith.constant 0 : index
    %c0_13 = arith.constant 0 : index
    %c0_14 = arith.constant 0 : index
    %15 = vector.load %arg3[%c0_11, %c0_12, %c0_13, %c0_14] : memref<3x8x8x8xf32, #tpu.memory_space<vmem>>, vector<1x1x8x8xf32>
    %16 = vector.shape_cast %15 : vector<1x1x8x8xf32> to vector<8x8xf32>
    %17 = vector.shape_cast %14 : vector<8x8xf32> to vector<1x1x8x8xf32>
    tpu.vector_store %arg3[%c0_11, %c0_12, %c0_13, %c0_14], %17 {strides = array<i32>} : memref<3x8x8x8xf32, #tpu.memory_space<vmem>>, vector<1x1x8x8xf32>,
    %c0_15 = arith.constant 0 : index
    %c1_16 = arith.constant 1 : index
    %c0_17 = arith.constant 0 : index
    %c0_18 = arith.constant 0 : index
    %18 = vector.load %arg4[%c0_15, %c1_16, %c0_17, %c0_18] : memref<3x8x16x256xf32, #tpu.memory_space<vmem>>, vector<1x1x16x256xf32>
    %19 = vector.shape_cast %18 : vector<1x1x16x256xf32> to vector<16x256xf32>
    %20 = tpu.dynamic_rotate %19 by %5 dim 0 : vector<16x256xf32>, i32 -> vector<16x256xf32>
    %21 = vector.extract_strided_slice %20 {offsets = [0, 0], sizes = [8, 256], strides = [1, 1]} : vector<16x256xf32> to vector<8x256xf32>
    %22 = tpu.dynamic_rotate %21 by %7 dim 1 : vector<8x256xf32>, i32 -> vector<8x256xf32>
    %23 = vector.extract_strided_slice %22 {offsets = [0, 0], sizes = [8, 8], strides = [1, 1]} : vector<8x256xf32> to vector<8x8xf32>
    %c0_19 = arith.constant 0 : index
    %c1_20 = arith.constant 1 : index
    %c0_21 = arith.constant 0 : index
    %c0_22 = arith.constant 0 : index
    %24 = vector.load %arg3[%c0_19, %c1_20, %c0_21, %c0_22] : memref<3x8x8x8xf32, #tpu.memory_space<vmem>>, vector<1x1x8x8xf32>
    %25 = vector.shape_cast %24 : vector<1x1x8x8xf32> to vector<8x8xf32>
    %26 = vector.shape_cast %23 : vector<8x8xf32> to vector<1x1x8x8xf32>
    tpu.vector_store %arg3[%c0_19, %c1_20, %c0_21, %c0_22], %26 {strides = array<i32>} : memref<3x8x8x8xf32, #tpu.memory_space<vmem>>, vector<1x1x8x8xf32>,
    %c0_23 = arith.constant 0 : index
    %c2_24 = arith.constant 2 : index
    %c0_25 = arith.constant 0 : index
    %c0_26 = arith.constant 0 : index
    %27 = vector.load %arg4[%c0_23, %c2_24, %c0_25, %c0_26] : memref<3x8x16x256xf32, #tpu.memory_space<vmem>>, vector<1x1x16x256xf32>
    %28 = vector.shape_cast %27 : vector<1x1x16x256xf32> to vector<16x256xf32>
    %29 = tpu.dynamic_rotate %28 by %5 dim 0 : vector<16x256xf32>, i32 -> vector<16x256xf32>
    %30 = vector.extract_strided_slice %29 {offsets = [0, 0], sizes = [8, 256], strides = [1, 1]} : vector<16x256xf32> to vector<8x256xf32>
    %31 = tpu.dynamic_rotate %30 by %7 dim 1 : vector<8x256xf32>, i32 -> vector<8x256xf32>
    %32 = vector.extract_strided_slice %31 {offsets = [0, 0], sizes = [8, 8], strides = [1, 1]} : vector<8x256xf32> to vector<8x8xf32>
    %c0_27 = arith.constant 0 : index
    %c2_28 = arith.constant 2 : index
    %c0_29 = arith.constant 0 : index
    %c0_30 = arith.constant 0 : index
    %33 = vector.load %arg3[%c0_27, %c2_28, %c0_29, %c0_30] : memref<3x8x8x8xf32, #tpu.memory_space<vmem>>, vector<1x1x8x8xf32>
    %34 = vector.shape_cast %33 : vector<1x1x8x8xf32> to vector<8x8xf32>
    %35 = vector.shape_cast %32 : vector<8x8xf32> to vector<1x1x8x8xf32>
    tpu.vector_store %arg3[%c0_27, %c2_28, %c0_29, %c0_30], %35 {strides = array<i32>} : memref<3x8x8x8xf32, #tpu.memory_space<vmem>>, vector<1x1x8x8xf32>,
    %c0_31 = arith.constant 0 : index
    %c3 = arith.constant 3 : index
    %c0_32 = arith.constant 0 : index
    %c0_33 = arith.constant 0 : index
    %36 = vector.load %arg4[%c0_31, %c3, %c0_32, %c0_33] : memref<3x8x16x256xf32, #tpu.memory_space<vmem>>, vector<1x1x16x256xf32>
    %37 = vector.shape_cast %36 : vector<1x1x16x256xf32> to vector<16x256xf32>
    %38 = tpu.dynamic_rotate %37 by %5 dim 0 : vector<16x256xf32>, i32 -> vector<16x256xf32>
    %39 = vector.extract_strided_slice %38 {offsets = [0, 0], sizes = [8, 256], strides = [1, 1]} : vector<16x256xf32> to vector<8x256xf32>
    %40 = tpu.dynamic_rotate %39 by %7 dim 1 : vector<8x256xf32>, i32 -> vector<8x256xf32>
    %41 = vector.extract_strided_slice %40 {offsets = [0, 0], sizes = [8, 8], strides = [1, 1]} : vector<8x256xf32> to vector<8x8xf32>
    %c0_34 = arith.constant 0 : index
    %c3_35 = arith.constant 3 : index
    %c0_36 = arith.constant 0 : index
    %c0_37 = arith.constant 0 : index
    %42 = vector.load %arg3[%c0_34, %c3_35, %c0_36, %c0_37] : memref<3x8x8x8xf32, #tpu.memory_space<vmem>>, vector<1x1x8x8xf32>
    %43 = vector.shape_cast %42 : vector<1x1x8x8xf32> to vector<8x8xf32>
    %44 = vector.shape_cast %41 : vector<8x8xf32> to vector<1x1x8x8xf32>
    tpu.vector_store %arg3[%c0_34, %c3_35, %c0_36, %c0_37], %44 {strides = array<i32>} : memref<3x8x8x8xf32, #tpu.memory_space<vmem>>, vector<1x1x8x8xf32>,
    %c0_38 = arith.constant 0 : index
    %c4 = arith.constant 4 : index
    %c0_39 = arith.constant 0 : index
    %c0_40 = arith.constant 0 : index
    %45 = vector.load %arg4[%c0_38, %c4, %c0_39, %c0_40] : memref<3x8x16x256xf32, #tpu.memory_space<vmem>>, vector<1x1x16x256xf32>
    %46 = vector.shape_cast %45 : vector<1x1x16x256xf32> to vector<16x256xf32>
    %47 = tpu.dynamic_rotate %46 by %5 dim 0 : vector<16x256xf32>, i32 -> vector<16x256xf32>
    %48 = vector.extract_strided_slice %47 {offsets = [0, 0], sizes = [8, 256], strides = [1, 1]} : vector<16x256xf32> to vector<8x256xf32>
    %49 = tpu.dynamic_rotate %48 by %7 dim 1 : vector<8x256xf32>, i32 -> vector<8x256xf32>
    %50 = vector.extract_strided_slice %49 {offsets = [0, 0], sizes = [8, 8], strides = [1, 1]} : vector<8x256xf32> to vector<8x8xf32>
    %c0_41 = arith.constant 0 : index
    %c4_42 = arith.constant 4 : index
    %c0_43 = arith.constant 0 : index
    %c0_44 = arith.constant 0 : index
    %51 = vector.load %arg3[%c0_41, %c4_42, %c0_43, %c0_44] : memref<3x8x8x8xf32, #tpu.memory_space<vmem>>, vector<1x1x8x8xf32>
    %52 = vector.shape_cast %51 : vector<1x1x8x8xf32> to vector<8x8xf32>
    %53 = vector.shape_cast %50 : vector<8x8xf32> to vector<1x1x8x8xf32>
    tpu.vector_store %arg3[%c0_41, %c4_42, %c0_43, %c0_44], %53 {strides = array<i32>} : memref<3x8x8x8xf32, #tpu.memory_space<vmem>>, vector<1x1x8x8xf32>,
    %c0_45 = arith.constant 0 : index
    %c5 = arith.constant 5 : index
    %c0_46 = arith.constant 0 : index
    %c0_47 = arith.constant 0 : index
    %54 = vector.load %arg4[%c0_45, %c5, %c0_46, %c0_47] : memref<3x8x16x256xf32, #tpu.memory_space<vmem>>, vector<1x1x16x256xf32>
    %55 = vector.shape_cast %54 : vector<1x1x16x256xf32> to vector<16x256xf32>
    %56 = tpu.dynamic_rotate %55 by %5 dim 0 : vector<16x256xf32>, i32 -> vector<16x256xf32>
    %57 = vector.extract_strided_slice %56 {offsets = [0, 0], sizes = [8, 256], strides = [1, 1]} : vector<16x256xf32> to vector<8x256xf32>
    %58 = tpu.dynamic_rotate %57 by %7 dim 1 : vector<8x256xf32>, i32 -> vector<8x256xf32>
    %59 = vector.extract_strided_slice %58 {offsets = [0, 0], sizes = [8, 8], strides = [1, 1]} : vector<8x256xf32> to vector<8x8xf32>
    %c0_48 = arith.constant 0 : index
    %c5_49 = arith.constant 5 : index
    %c0_50 = arith.constant 0 : index
    %c0_51 = arith.constant 0 : index
    %60 = vector.load %arg3[%c0_48, %c5_49, %c0_50, %c0_51] : memref<3x8x8x8xf32, #tpu.memory_space<vmem>>, vector<1x1x8x8xf32>
    %61 = vector.shape_cast %60 : vector<1x1x8x8xf32> to vector<8x8xf32>
    %62 = vector.shape_cast %59 : vector<8x8xf32> to vector<1x1x8x8xf32>
    tpu.vector_store %arg3[%c0_48, %c5_49, %c0_50, %c0_51], %62 {strides = array<i32>} : memref<3x8x8x8xf32, #tpu.memory_space<vmem>>, vector<1x1x8x8xf32>,
    %c0_52 = arith.constant 0 : index
    %c6 = arith.constant 6 : index
    %c0_53 = arith.constant 0 : index
    %c0_54 = arith.constant 0 : index
    %63 = vector.load %arg4[%c0_52, %c6, %c0_53, %c0_54] : memref<3x8x16x256xf32, #tpu.memory_space<vmem>>, vector<1x1x16x256xf32>
    %64 = vector.shape_cast %63 : vector<1x1x16x256xf32> to vector<16x256xf32>
    %65 = tpu.dynamic_rotate %64 by %5 dim 0 : vector<16x256xf32>, i32 -> vector<16x256xf32>
    %66 = vector.extract_strided_slice %65 {offsets = [0, 0], sizes = [8, 256], strides = [1, 1]} : vector<16x256xf32> to vector<8x256xf32>
    %67 = tpu.dynamic_rotate %66 by %7 dim 1 : vector<8x256xf32>, i32 -> vector<8x256xf32>
    %68 = vector.extract_strided_slice %67 {offsets = [0, 0], sizes = [8, 8], strides = [1, 1]} : vector<8x256xf32> to vector<8x8xf32>
    %c0_55 = arith.constant 0 : index
    %c6_56 = arith.constant 6 : index
    %c0_57 = arith.constant 0 : index
    %c0_58 = arith.constant 0 : index
    %69 = vector.load %arg3[%c0_55, %c6_56, %c0_57, %c0_58] : memref<3x8x8x8xf32, #tpu.memory_space<vmem>>, vector<1x1x8x8xf32>
    %70 = vector.shape_cast %69 : vector<1x1x8x8xf32> to vector<8x8xf32>
    %71 = vector.shape_cast %68 : vector<8x8xf32> to vector<1x1x8x8xf32>
    tpu.vector_store %arg3[%c0_55, %c6_56, %c0_57, %c0_58], %71 {strides = array<i32>} : memref<3x8x8x8xf32, #tpu.memory_space<vmem>>, vector<1x1x8x8xf32>,
    %c0_59 = arith.constant 0 : index
    %c7 = arith.constant 7 : index
    %c0_60 = arith.constant 0 : index
    %c0_61 = arith.constant 0 : index
    %72 = vector.load %arg4[%c0_59, %c7, %c0_60, %c0_61] : memref<3x8x16x256xf32, #tpu.memory_space<vmem>>, vector<1x1x16x256xf32>
    %73 = vector.shape_cast %72 : vector<1x1x16x256xf32> to vector<16x256xf32>
    %74 = tpu.dynamic_rotate %73 by %5 dim 0 : vector<16x256xf32>, i32 -> vector<16x256xf32>
    %75 = vector.extract_strided_slice %74 {offsets = [0, 0], sizes = [8, 256], strides = [1, 1]} : vector<16x256xf32> to vector<8x256xf32>
    %76 = tpu.dynamic_rotate %75 by %7 dim 1 : vector<8x256xf32>, i32 -> vector<8x256xf32>
    %77 = vector.extract_strided_slice %76 {offsets = [0, 0], sizes = [8, 8], strides = [1, 1]} : vector<8x256xf32> to vector<8x8xf32>
    %c0_62 = arith.constant 0 : index
    %c7_63 = arith.constant 7 : index
    %c0_64 = arith.constant 0 : index
    %c0_65 = arith.constant 0 : index
    %78 = vector.load %arg3[%c0_62, %c7_63, %c0_64, %c0_65] : memref<3x8x8x8xf32, #tpu.memory_space<vmem>>, vector<1x1x8x8xf32>
    %79 = vector.shape_cast %78 : vector<1x1x8x8xf32> to vector<8x8xf32>
    %80 = vector.shape_cast %77 : vector<8x8xf32> to vector<1x1x8x8xf32>
    tpu.vector_store %arg3[%c0_62, %c7_63, %c0_64, %c0_65], %80 {strides = array<i32>} : memref<3x8x8x8xf32, #tpu.memory_space<vmem>>, vector<1x1x8x8xf32>,
    %c1_66 = arith.constant 1 : index
    %c0_67 = arith.constant 0 : index
    %c0_68 = arith.constant 0 : index
    %c0_69 = arith.constant 0 : index
    %81 = vector.load %arg4[%c1_66, %c0_67, %c0_68, %c0_69] : memref<3x8x16x256xf32, #tpu.memory_space<vmem>>, vector<1x1x16x256xf32>
    %82 = vector.shape_cast %81 : vector<1x1x16x256xf32> to vector<16x256xf32>
    %83 = tpu.dynamic_rotate %82 by %5 dim 0 : vector<16x256xf32>, i32 -> vector<16x256xf32>
    %84 = vector.extract_strided_slice %83 {offsets = [0, 0], sizes = [8, 256], strides = [1, 1]} : vector<16x256xf32> to vector<8x256xf32>
    %85 = tpu.dynamic_rotate %84 by %7 dim 1 : vector<8x256xf32>, i32 -> vector<8x256xf32>
    %86 = vector.extract_strided_slice %85 {offsets = [0, 0], sizes = [8, 8], strides = [1, 1]} : vector<8x256xf32> to vector<8x8xf32>
    %c1_70 = arith.constant 1 : index
    %c0_71 = arith.constant 0 : index
    %c0_72 = arith.constant 0 : index
    %c0_73 = arith.constant 0 : index
    %87 = vector.load %arg3[%c1_70, %c0_71, %c0_72, %c0_73] : memref<3x8x8x8xf32, #tpu.memory_space<vmem>>, vector<1x1x8x8xf32>
    %88 = vector.shape_cast %87 : vector<1x1x8x8xf32> to vector<8x8xf32>
    %89 = vector.shape_cast %86 : vector<8x8xf32> to vector<1x1x8x8xf32>
    tpu.vector_store %arg3[%c1_70, %c0_71, %c0_72, %c0_73], %89 {strides = array<i32>} : memref<3x8x8x8xf32, #tpu.memory_space<vmem>>, vector<1x1x8x8xf32>,
    %c1_74 = arith.constant 1 : index
    %c1_75 = arith.constant 1 : index
    %c0_76 = arith.constant 0 : index
    %c0_77 = arith.constant 0 : index
    %90 = vector.load %arg4[%c1_74, %c1_75, %c0_76, %c0_77] : memref<3x8x16x256xf32, #tpu.memory_space<vmem>>, vector<1x1x16x256xf32>
    %91 = vector.shape_cast %90 : vector<1x1x16x256xf32> to vector<16x256xf32>
    %92 = tpu.dynamic_rotate %91 by %5 dim 0 : vector<16x256xf32>, i32 -> vector<16x256xf32>
    %93 = vector.extract_strided_slice %92 {offsets = [0, 0], sizes = [8, 256], strides = [1, 1]} : vector<16x256xf32> to vector<8x256xf32>
    %94 = tpu.dynamic_rotate %93 by %7 dim 1 : vector<8x256xf32>, i32 -> vector<8x256xf32>
    %95 = vector.extract_strided_slice %94 {offsets = [0, 0], sizes = [8, 8], strides = [1, 1]} : vector<8x256xf32> to vector<8x8xf32>
    %c1_78 = arith.constant 1 : index
    %c1_79 = arith.constant 1 : index
    %c0_80 = arith.constant 0 : index
    %c0_81 = arith.constant 0 : index
    %96 = vector.load %arg3[%c1_78, %c1_79, %c0_80, %c0_81] : memref<3x8x8x8xf32, #tpu.memory_space<vmem>>, vector<1x1x8x8xf32>
    %97 = vector.shape_cast %96 : vector<1x1x8x8xf32> to vector<8x8xf32>
    %98 = vector.shape_cast %95 : vector<8x8xf32> to vector<1x1x8x8xf32>
    tpu.vector_store %arg3[%c1_78, %c1_79, %c0_80, %c0_81], %98 {strides = array<i32>} : memref<3x8x8x8xf32, #tpu.memory_space<vmem>>, vector<1x1x8x8xf32>,
    %c1_82 = arith.constant 1 : index
    %c2_83 = arith.constant 2 : index
    %c0_84 = arith.constant 0 : index
    %c0_85 = arith.constant 0 : index
    %99 = vector.load %arg4[%c1_82, %c2_83, %c0_84, %c0_85] : memref<3x8x16x256xf32, #tpu.memory_space<vmem>>, vector<1x1x16x256xf32>
    %100 = vector.shape_cast %99 : vector<1x1x16x256xf32> to vector<16x256xf32>
    %101 = tpu.dynamic_rotate %100 by %5 dim 0 : vector<16x256xf32>, i32 -> vector<16x256xf32>
    %102 = vector.extract_strided_slice %101 {offsets = [0, 0], sizes = [8, 256], strides = [1, 1]} : vector<16x256xf32> to vector<8x256xf32>
    %103 = tpu.dynamic_rotate %102 by %7 dim 1 : vector<8x256xf32>, i32 -> vector<8x256xf32>
    %104 = vector.extract_strided_slice %103 {offsets = [0, 0], sizes = [8, 8], strides = [1, 1]} : vector<8x256xf32> to vector<8x8xf32>
    %c1_86 = arith.constant 1 : index
    %c2_87 = arith.constant 2 : index
    %c0_88 = arith.constant 0 : index
    %c0_89 = arith.constant 0 : index
    %105 = vector.load %arg3[%c1_86, %c2_87, %c0_88, %c0_89] : memref<3x8x8x8xf32, #tpu.memory_space<vmem>>, vector<1x1x8x8xf32>
    %106 = vector.shape_cast %105 : vector<1x1x8x8xf32> to vector<8x8xf32>
    %107 = vector.shape_cast %104 : vector<8x8xf32> to vector<1x1x8x8xf32>
    tpu.vector_store %arg3[%c1_86, %c2_87, %c0_88, %c0_89], %107 {strides = array<i32>} : memref<3x8x8x8xf32, #tpu.memory_space<vmem>>, vector<1x1x8x8xf32>,
    %c1_90 = arith.constant 1 : index
    %c3_91 = arith.constant 3 : index
    %c0_92 = arith.constant 0 : index
    %c0_93 = arith.constant 0 : index
    %108 = vector.load %arg4[%c1_90, %c3_91, %c0_92, %c0_93] : memref<3x8x16x256xf32, #tpu.memory_space<vmem>>, vector<1x1x16x256xf32>
    %109 = vector.shape_cast %108 : vector<1x1x16x256xf32> to vector<16x256xf32>
    %110 = tpu.dynamic_rotate %109 by %5 dim 0 : vector<16x256xf32>, i32 -> vector<16x256xf32>
    %111 = vector.extract_strided_slice %110 {offsets = [0, 0], sizes = [8, 256], strides = [1, 1]} : vector<16x256xf32> to vector<8x256xf32>
    %112 = tpu.dynamic_rotate %111 by %7 dim 1 : vector<8x256xf32>, i32 -> vector<8x256xf32>
    %113 = vector.extract_strided_slice %112 {offsets = [0, 0], sizes = [8, 8], strides = [1, 1]} : vector<8x256xf32> to vector<8x8xf32>
    %c1_94 = arith.constant 1 : index
    %c3_95 = arith.constant 3 : index
    %c0_96 = arith.constant 0 : index
    %c0_97 = arith.constant 0 : index
    %114 = vector.load %arg3[%c1_94, %c3_95, %c0_96, %c0_97] : memref<3x8x8x8xf32, #tpu.memory_space<vmem>>, vector<1x1x8x8xf32>
    %115 = vector.shape_cast %114 : vector<1x1x8x8xf32> to vector<8x8xf32>
    %116 = vector.shape_cast %113 : vector<8x8xf32> to vector<1x1x8x8xf32>
    tpu.vector_store %arg3[%c1_94, %c3_95, %c0_96, %c0_97], %116 {strides = array<i32>} : memref<3x8x8x8xf32, #tpu.memory_space<vmem>>, vector<1x1x8x8xf32>,
    %c1_98 = arith.constant 1 : index
    %c4_99 = arith.constant 4 : index
    %c0_100 = arith.constant 0 : index
    %c0_101 = arith.constant 0 : index
    %117 = vector.load %arg4[%c1_98, %c4_99, %c0_100, %c0_101] : memref<3x8x16x256xf32, #tpu.memory_space<vmem>>, vector<1x1x16x256xf32>
    %118 = vector.shape_cast %117 : vector<1x1x16x256xf32> to vector<16x256xf32>
    %119 = tpu.dynamic_rotate %118 by %5 dim 0 : vector<16x256xf32>, i32 -> vector<16x256xf32>
    %120 = vector.extract_strided_slice %119 {offsets = [0, 0], sizes = [8, 256], strides = [1, 1]} : vector<16x256xf32> to vector<8x256xf32>
    %121 = tpu.dynamic_rotate %120 by %7 dim 1 : vector<8x256xf32>, i32 -> vector<8x256xf32>
    %122 = vector.extract_strided_slice %121 {offsets = [0, 0], sizes = [8, 8], strides = [1, 1]} : vector<8x256xf32> to vector<8x8xf32>
    %c1_102 = arith.constant 1 : index
    %c4_103 = arith.constant 4 : index
    %c0_104 = arith.constant 0 : index
    %c0_105 = arith.constant 0 : index
    %123 = vector.load %arg3[%c1_102, %c4_103, %c0_104, %c0_105] : memref<3x8x8x8xf32, #tpu.memory_space<vmem>>, vector<1x1x8x8xf32>
    %124 = vector.shape_cast %123 : vector<1x1x8x8xf32> to vector<8x8xf32>
    %125 = vector.shape_cast %122 : vector<8x8xf32> to vector<1x1x8x8xf32>
    tpu.vector_store %arg3[%c1_102, %c4_103, %c0_104, %c0_105], %125 {strides = array<i32>} : memref<3x8x8x8xf32, #tpu.memory_space<vmem>>, vector<1x1x8x8xf32>,
    %c1_106 = arith.constant 1 : index
    %c5_107 = arith.constant 5 : index
    %c0_108 = arith.constant 0 : index
    %c0_109 = arith.constant 0 : index
    %126 = vector.load %arg4[%c1_106, %c5_107, %c0_108, %c0_109] : memref<3x8x16x256xf32, #tpu.memory_space<vmem>>, vector<1x1x16x256xf32>
    %127 = vector.shape_cast %126 : vector<1x1x16x256xf32> to vector<16x256xf32>
    %128 = tpu.dynamic_rotate %127 by %5 dim 0 : vector<16x256xf32>, i32 -> vector<16x256xf32>
    %129 = vector.extract_strided_slice %128 {offsets = [0, 0], sizes = [8, 256], strides = [1, 1]} : vector<16x256xf32> to vector<8x256xf32>
    %130 = tpu.dynamic_rotate %129 by %7 dim 1 : vector<8x256xf32>, i32 -> vector<8x256xf32>
    %131 = vector.extract_strided_slice %130 {offsets = [0, 0], sizes = [8, 8], strides = [1, 1]} : vector<8x256xf32> to vector<8x8xf32>
    %c1_110 = arith.constant 1 : index
    %c5_111 = arith.constant 5 : index
    %c0_112 = arith.constant 0 : index
    %c0_113 = arith.constant 0 : index
    %132 = vector.load %arg3[%c1_110, %c5_111, %c0_112, %c0_113] : memref<3x8x8x8xf32, #tpu.memory_space<vmem>>, vector<1x1x8x8xf32>
    %133 = vector.shape_cast %132 : vector<1x1x8x8xf32> to vector<8x8xf32>
    %134 = vector.shape_cast %131 : vector<8x8xf32> to vector<1x1x8x8xf32>
    tpu.vector_store %arg3[%c1_110, %c5_111, %c0_112, %c0_113], %134 {strides = array<i32>} : memref<3x8x8x8xf32, #tpu.memory_space<vmem>>, vector<1x1x8x8xf32>,
    %c1_114 = arith.constant 1 : index
    %c6_115 = arith.constant 6 : index
    %c0_116 = arith.constant 0 : index
    %c0_117 = arith.constant 0 : index
    %135 = vector.load %arg4[%c1_114, %c6_115, %c0_116, %c0_117] : memref<3x8x16x256xf32, #tpu.memory_space<vmem>>, vector<1x1x16x256xf32>
    %136 = vector.shape_cast %135 : vector<1x1x16x256xf32> to vector<16x256xf32>
    %137 = tpu.dynamic_rotate %136 by %5 dim 0 : vector<16x256xf32>, i32 -> vector<16x256xf32>
    %138 = vector.extract_strided_slice %137 {offsets = [0, 0], sizes = [8, 256], strides = [1, 1]} : vector<16x256xf32> to vector<8x256xf32>
    %139 = tpu.dynamic_rotate %138 by %7 dim 1 : vector<8x256xf32>, i32 -> vector<8x256xf32>
    %140 = vector.extract_strided_slice %139 {offsets = [0, 0], sizes = [8, 8], strides = [1, 1]} : vector<8x256xf32> to vector<8x8xf32>
    %c1_118 = arith.constant 1 : index
    %c6_119 = arith.constant 6 : index
    %c0_120 = arith.constant 0 : index
    %c0_121 = arith.constant 0 : index
    %141 = vector.load %arg3[%c1_118, %c6_119, %c0_120, %c0_121] : memref<3x8x8x8xf32, #tpu.memory_space<vmem>>, vector<1x1x8x8xf32>
    %142 = vector.shape_cast %141 : vector<1x1x8x8xf32> to vector<8x8xf32>
    %143 = vector.shape_cast %140 : vector<8x8xf32> to vector<1x1x8x8xf32>
    tpu.vector_store %arg3[%c1_118, %c6_119, %c0_120, %c0_121], %143 {strides = array<i32>} : memref<3x8x8x8xf32, #tpu.memory_space<vmem>>, vector<1x1x8x8xf32>,
    %c1_122 = arith.constant 1 : index
    %c7_123 = arith.constant 7 : index
    %c0_124 = arith.constant 0 : index
    %c0_125 = arith.constant 0 : index
    %144 = vector.load %arg4[%c1_122, %c7_123, %c0_124, %c0_125] : memref<3x8x16x256xf32, #tpu.memory_space<vmem>>, vector<1x1x16x256xf32>
    %145 = vector.shape_cast %144 : vector<1x1x16x256xf32> to vector<16x256xf32>
    %146 = tpu.dynamic_rotate %145 by %5 dim 0 : vector<16x256xf32>, i32 -> vector<16x256xf32>
    %147 = vector.extract_strided_slice %146 {offsets = [0, 0], sizes = [8, 256], strides = [1, 1]} : vector<16x256xf32> to vector<8x256xf32>
    %148 = tpu.dynamic_rotate %147 by %7 dim 1 : vector<8x256xf32>, i32 -> vector<8x256xf32>
    %149 = vector.extract_strided_slice %148 {offsets = [0, 0], sizes = [8, 8], strides = [1, 1]} : vector<8x256xf32> to vector<8x8xf32>
    %c1_126 = arith.constant 1 : index
    %c7_127 = arith.constant 7 : index
    %c0_128 = arith.constant 0 : index
    %c0_129 = arith.constant 0 : index
    %150 = vector.load %arg3[%c1_126, %c7_127, %c0_128, %c0_129] : memref<3x8x8x8xf32, #tpu.memory_space<vmem>>, vector<1x1x8x8xf32>
    %151 = vector.shape_cast %150 : vector<1x1x8x8xf32> to vector<8x8xf32>
    %152 = vector.shape_cast %149 : vector<8x8xf32> to vector<1x1x8x8xf32>
    tpu.vector_store %arg3[%c1_126, %c7_127, %c0_128, %c0_129], %152 {strides = array<i32>} : memref<3x8x8x8xf32, #tpu.memory_space<vmem>>, vector<1x1x8x8xf32>,
    %c2_130 = arith.constant 2 : index
    %c0_131 = arith.constant 0 : index
    %c0_132 = arith.constant 0 : index
    %c0_133 = arith.constant 0 : index
    %153 = vector.load %arg4[%c2_130, %c0_131, %c0_132, %c0_133] : memref<3x8x16x256xf32, #tpu.memory_space<vmem>>, vector<1x1x16x256xf32>
    %154 = vector.shape_cast %153 : vector<1x1x16x256xf32> to vector<16x256xf32>
    %155 = tpu.dynamic_rotate %154 by %5 dim 0 : vector<16x256xf32>, i32 -> vector<16x256xf32>
    %156 = vector.extract_strided_slice %155 {offsets = [0, 0], sizes = [8, 256], strides = [1, 1]} : vector<16x256xf32> to vector<8x256xf32>
    %157 = tpu.dynamic_rotate %156 by %7 dim 1 : vector<8x256xf32>, i32 -> vector<8x256xf32>
    %158 = vector.extract_strided_slice %157 {offsets = [0, 0], sizes = [8, 8], strides = [1, 1]} : vector<8x256xf32> to vector<8x8xf32>
    %c2_134 = arith.constant 2 : index
    %c0_135 = arith.constant 0 : index
    %c0_136 = arith.constant 0 : index
    %c0_137 = arith.constant 0 : index
    %159 = vector.load %arg3[%c2_134, %c0_135, %c0_136, %c0_137] : memref<3x8x8x8xf32, #tpu.memory_space<vmem>>, vector<1x1x8x8xf32>
    %160 = vector.shape_cast %159 : vector<1x1x8x8xf32> to vector<8x8xf32>
    %161 = vector.shape_cast %158 : vector<8x8xf32> to vector<1x1x8x8xf32>
    tpu.vector_store %arg3[%c2_134, %c0_135, %c0_136, %c0_137], %161 {strides = array<i32>} : memref<3x8x8x8xf32, #tpu.memory_space<vmem>>, vector<1x1x8x8xf32>,
    %c2_138 = arith.constant 2 : index
    %c1_139 = arith.constant 1 : index
    %c0_140 = arith.constant 0 : index
    %c0_141 = arith.constant 0 : index
    %162 = vector.load %arg4[%c2_138, %c1_139, %c0_140, %c0_141] : memref<3x8x16x256xf32, #tpu.memory_space<vmem>>, vector<1x1x16x256xf32>
    %163 = vector.shape_cast %162 : vector<1x1x16x256xf32> to vector<16x256xf32>
    %164 = tpu.dynamic_rotate %163 by %5 dim 0 : vector<16x256xf32>, i32 -> vector<16x256xf32>
    %165 = vector.extract_strided_slice %164 {offsets = [0, 0], sizes = [8, 256], strides = [1, 1]} : vector<16x256xf32> to vector<8x256xf32>
    %166 = tpu.dynamic_rotate %165 by %7 dim 1 : vector<8x256xf32>, i32 -> vector<8x256xf32>
    %167 = vector.extract_strided_slice %166 {offsets = [0, 0], sizes = [8, 8], strides = [1, 1]} : vector<8x256xf32> to vector<8x8xf32>
    %c2_142 = arith.constant 2 : index
    %c1_143 = arith.constant 1 : index
    %c0_144 = arith.constant 0 : index
    %c0_145 = arith.constant 0 : index
    %168 = vector.load %arg3[%c2_142, %c1_143, %c0_144, %c0_145] : memref<3x8x8x8xf32, #tpu.memory_space<vmem>>, vector<1x1x8x8xf32>
    %169 = vector.shape_cast %168 : vector<1x1x8x8xf32> to vector<8x8xf32>
    %170 = vector.shape_cast %167 : vector<8x8xf32> to vector<1x1x8x8xf32>
    tpu.vector_store %arg3[%c2_142, %c1_143, %c0_144, %c0_145], %170 {strides = array<i32>} : memref<3x8x8x8xf32, #tpu.memory_space<vmem>>, vector<1x1x8x8xf32>,
    %c2_146 = arith.constant 2 : index
    %c2_147 = arith.constant 2 : index
    %c0_148 = arith.constant 0 : index
    %c0_149 = arith.constant 0 : index
    %171 = vector.load %arg4[%c2_146, %c2_147, %c0_148, %c0_149] : memref<3x8x16x256xf32, #tpu.memory_space<vmem>>, vector<1x1x16x256xf32>
    %172 = vector.shape_cast %171 : vector<1x1x16x256xf32> to vector<16x256xf32>
    %173 = tpu.dynamic_rotate %172 by %5 dim 0 : vector<16x256xf32>, i32 -> vector<16x256xf32>
    %174 = vector.extract_strided_slice %173 {offsets = [0, 0], sizes = [8, 256], strides = [1, 1]} : vector<16x256xf32> to vector<8x256xf32>
    %175 = tpu.dynamic_rotate %174 by %7 dim 1 : vector<8x256xf32>, i32 -> vector<8x256xf32>
    %176 = vector.extract_strided_slice %175 {offsets = [0, 0], sizes = [8, 8], strides = [1, 1]} : vector<8x256xf32> to vector<8x8xf32>
    %c2_150 = arith.constant 2 : index
    %c2_151 = arith.constant 2 : index
    %c0_152 = arith.constant 0 : index
    %c0_153 = arith.constant 0 : index
    %177 = vector.load %arg3[%c2_150, %c2_151, %c0_152, %c0_153] : memref<3x8x8x8xf32, #tpu.memory_space<vmem>>, vector<1x1x8x8xf32>
    %178 = vector.shape_cast %177 : vector<1x1x8x8xf32> to vector<8x8xf32>
    %179 = vector.shape_cast %176 : vector<8x8xf32> to vector<1x1x8x8xf32>
    tpu.vector_store %arg3[%c2_150, %c2_151, %c0_152, %c0_153], %179 {strides = array<i32>} : memref<3x8x8x8xf32, #tpu.memory_space<vmem>>, vector<1x1x8x8xf32>,
    %c2_154 = arith.constant 2 : index
    %c3_155 = arith.constant 3 : index
    %c0_156 = arith.constant 0 : index
    %c0_157 = arith.constant 0 : index
    %180 = vector.load %arg4[%c2_154, %c3_155, %c0_156, %c0_157] : memref<3x8x16x256xf32, #tpu.memory_space<vmem>>, vector<1x1x16x256xf32>
    %181 = vector.shape_cast %180 : vector<1x1x16x256xf32> to vector<16x256xf32>
    %182 = tpu.dynamic_rotate %181 by %5 dim 0 : vector<16x256xf32>, i32 -> vector<16x256xf32>
    %183 = vector.extract_strided_slice %182 {offsets = [0, 0], sizes = [8, 256], strides = [1, 1]} : vector<16x256xf32> to vector<8x256xf32>
    %184 = tpu.dynamic_rotate %183 by %7 dim 1 : vector<8x256xf32>, i32 -> vector<8x256xf32>
    %185 = vector.extract_strided_slice %184 {offsets = [0, 0], sizes = [8, 8], strides = [1, 1]} : vector<8x256xf32> to vector<8x8xf32>
    %c2_158 = arith.constant 2 : index
    %c3_159 = arith.constant 3 : index
    %c0_160 = arith.constant 0 : index
    %c0_161 = arith.constant 0 : index
    %186 = vector.load %arg3[%c2_158, %c3_159, %c0_160, %c0_161] : memref<3x8x8x8xf32, #tpu.memory_space<vmem>>, vector<1x1x8x8xf32>
    %187 = vector.shape_cast %186 : vector<1x1x8x8xf32> to vector<8x8xf32>
    %188 = vector.shape_cast %185 : vector<8x8xf32> to vector<1x1x8x8xf32>
    tpu.vector_store %arg3[%c2_158, %c3_159, %c0_160, %c0_161], %188 {strides = array<i32>} : memref<3x8x8x8xf32, #tpu.memory_space<vmem>>, vector<1x1x8x8xf32>,
    %c2_162 = arith.constant 2 : index
    %c4_163 = arith.constant 4 : index
    %c0_164 = arith.constant 0 : index
    %c0_165 = arith.constant 0 : index
    %189 = vector.load %arg4[%c2_162, %c4_163, %c0_164, %c0_165] : memref<3x8x16x256xf32, #tpu.memory_space<vmem>>, vector<1x1x16x256xf32>
    %190 = vector.shape_cast %189 : vector<1x1x16x256xf32> to vector<16x256xf32>
    %191 = tpu.dynamic_rotate %190 by %5 dim 0 : vector<16x256xf32>, i32 -> vector<16x256xf32>
    %192 = vector.extract_strided_slice %191 {offsets = [0, 0], sizes = [8, 256], strides = [1, 1]} : vector<16x256xf32> to vector<8x256xf32>
    %193 = tpu.dynamic_rotate %192 by %7 dim 1 : vector<8x256xf32>, i32 -> vector<8x256xf32>
    %194 = vector.extract_strided_slice %193 {offsets = [0, 0], sizes = [8, 8], strides = [1, 1]} : vector<8x256xf32> to vector<8x8xf32>
    %c2_166 = arith.constant 2 : index
    %c4_167 = arith.constant 4 : index
    %c0_168 = arith.constant 0 : index
    %c0_169 = arith.constant 0 : index
    %195 = vector.load %arg3[%c2_166, %c4_167, %c0_168, %c0_169] : memref<3x8x8x8xf32, #tpu.memory_space<vmem>>, vector<1x1x8x8xf32>
    %196 = vector.shape_cast %195 : vector<1x1x8x8xf32> to vector<8x8xf32>
    %197 = vector.shape_cast %194 : vector<8x8xf32> to vector<1x1x8x8xf32>
    tpu.vector_store %arg3[%c2_166, %c4_167, %c0_168, %c0_169], %197 {strides = array<i32>} : memref<3x8x8x8xf32, #tpu.memory_space<vmem>>, vector<1x1x8x8xf32>,
    %c2_170 = arith.constant 2 : index
    %c5_171 = arith.constant 5 : index
    %c0_172 = arith.constant 0 : index
    %c0_173 = arith.constant 0 : index
    %198 = vector.load %arg4[%c2_170, %c5_171, %c0_172, %c0_173] : memref<3x8x16x256xf32, #tpu.memory_space<vmem>>, vector<1x1x16x256xf32>
    %199 = vector.shape_cast %198 : vector<1x1x16x256xf32> to vector<16x256xf32>
    %200 = tpu.dynamic_rotate %199 by %5 dim 0 : vector<16x256xf32>, i32 -> vector<16x256xf32>
    %201 = vector.extract_strided_slice %200 {offsets = [0, 0], sizes = [8, 256], strides = [1, 1]} : vector<16x256xf32> to vector<8x256xf32>
    %202 = tpu.dynamic_rotate %201 by %7 dim 1 : vector<8x256xf32>, i32 -> vector<8x256xf32>
    %203 = vector.extract_strided_slice %202 {offsets = [0, 0], sizes = [8, 8], strides = [1, 1]} : vector<8x256xf32> to vector<8x8xf32>
    %c2_174 = arith.constant 2 : index
    %c5_175 = arith.constant 5 : index
    %c0_176 = arith.constant 0 : index
    %c0_177 = arith.constant 0 : index
    %204 = vector.load %arg3[%c2_174, %c5_175, %c0_176, %c0_177] : memref<3x8x8x8xf32, #tpu.memory_space<vmem>>, vector<1x1x8x8xf32>
    %205 = vector.shape_cast %204 : vector<1x1x8x8xf32> to vector<8x8xf32>
    %206 = vector.shape_cast %203 : vector<8x8xf32> to vector<1x1x8x8xf32>
    tpu.vector_store %arg3[%c2_174, %c5_175, %c0_176, %c0_177], %206 {strides = array<i32>} : memref<3x8x8x8xf32, #tpu.memory_space<vmem>>, vector<1x1x8x8xf32>,
    %c2_178 = arith.constant 2 : index
    %c6_179 = arith.constant 6 : index
    %c0_180 = arith.constant 0 : index
    %c0_181 = arith.constant 0 : index
    %207 = vector.load %arg4[%c2_178, %c6_179, %c0_180, %c0_181] : memref<3x8x16x256xf32, #tpu.memory_space<vmem>>, vector<1x1x16x256xf32>
    %208 = vector.shape_cast %207 : vector<1x1x16x256xf32> to vector<16x256xf32>
    %209 = tpu.dynamic_rotate %208 by %5 dim 0 : vector<16x256xf32>, i32 -> vector<16x256xf32>
    %210 = vector.extract_strided_slice %209 {offsets = [0, 0], sizes = [8, 256], strides = [1, 1]} : vector<16x256xf32> to vector<8x256xf32>
    %211 = tpu.dynamic_rotate %210 by %7 dim 1 : vector<8x256xf32>, i32 -> vector<8x256xf32>
    %212 = vector.extract_strided_slice %211 {offsets = [0, 0], sizes = [8, 8], strides = [1, 1]} : vector<8x256xf32> to vector<8x8xf32>
    %c2_182 = arith.constant 2 : index
    %c6_183 = arith.constant 6 : index
    %c0_184 = arith.constant 0 : index
    %c0_185 = arith.constant 0 : index
    %213 = vector.load %arg3[%c2_182, %c6_183, %c0_184, %c0_185] : memref<3x8x8x8xf32, #tpu.memory_space<vmem>>, vector<1x1x8x8xf32>
    %214 = vector.shape_cast %213 : vector<1x1x8x8xf32> to vector<8x8xf32>
    %215 = vector.shape_cast %212 : vector<8x8xf32> to vector<1x1x8x8xf32>
    tpu.vector_store %arg3[%c2_182, %c6_183, %c0_184, %c0_185], %215 {strides = array<i32>} : memref<3x8x8x8xf32, #tpu.memory_space<vmem>>, vector<1x1x8x8xf32>,
    %c2_186 = arith.constant 2 : index
    %c7_187 = arith.constant 7 : index
    %c0_188 = arith.constant 0 : index
    %c0_189 = arith.constant 0 : index
    %216 = vector.load %arg4[%c2_186, %c7_187, %c0_188, %c0_189] : memref<3x8x16x256xf32, #tpu.memory_space<vmem>>, vector<1x1x16x256xf32>
    %217 = vector.shape_cast %216 : vector<1x1x16x256xf32> to vector<16x256xf32>
    %218 = tpu.dynamic_rotate %217 by %5 dim 0 : vector<16x256xf32>, i32 -> vector<16x256xf32>
    %219 = vector.extract_strided_slice %218 {offsets = [0, 0], sizes = [8, 256], strides = [1, 1]} : vector<16x256xf32> to vector<8x256xf32>
    %220 = tpu.dynamic_rotate %219 by %7 dim 1 : vector<8x256xf32>, i32 -> vector<8x256xf32>
    %221 = vector.extract_strided_slice %220 {offsets = [0, 0], sizes = [8, 8], strides = [1, 1]} : vector<8x256xf32> to vector<8x8xf32>
    %c2_190 = arith.constant 2 : index
    %c7_191 = arith.constant 7 : index
    %c0_192 = arith.constant 0 : index
    %c0_193 = arith.constant 0 : index
    %222 = vector.load %arg3[%c2_190, %c7_191, %c0_192, %c0_193] : memref<3x8x8x8xf32, #tpu.memory_space<vmem>>, vector<1x1x8x8xf32>
    %223 = vector.shape_cast %222 : vector<1x1x8x8xf32> to vector<8x8xf32>
    %224 = vector.shape_cast %221 : vector<8x8xf32> to vector<1x1x8x8xf32>
    tpu.vector_store %arg3[%c2_190, %c7_191, %c0_192, %c0_193], %224 {strides = array<i32>} : memref<3x8x8x8xf32, #tpu.memory_space<vmem>>, vector<1x1x8x8xf32>,
    return
  }
  func.func @transform_1(%arg0: i32, %arg1: memref<3xi32, #tpu.memory_space<smem>>) -> (i32, i32, i32, i32) {
    %c0_i32 = arith.constant 0 : i32
    %c0_i32_0 = arith.constant 0 : i32
    %c0_i32_1 = arith.constant 0 : i32
    %c0_i32_2 = arith.constant 0 : i32
    %c0_i32_3 = arith.constant 0 : i32
    return %c0_i32, %c0_i32_0, %c0_i32_1, %c0_i32_2 : i32, i32, i32, i32
  }
}

</mosaic_0001>

<llo_original>
// kernel: tpu_custom_call.1
$region0: #{tpu_custom_call.1}
  #allocation0 [shape = 'u32[]', space=smem, size = 0x4, offset = 0x4, fixed_abs, tag = 'smem constant byte address 0x4 - core index']
  #allocation1 [shape = 'u32[144,128]{1,0:T(1,128)}', space=vmem, size = 0x12000, scoped, tag = 'internal scratch']
  #allocation2 [shape = 'f32[3,8,16,256]{3,2,1,0:T(8,128)}', space=vmem, size = 0x60000, scoped, tag = 'scratch operand']
  #allocation3 [shape = 's32[1]{0}', space=sflag, size = 0x4, scoped, tag = 'scratch operand']
  #allocation4 [shape = 's32[1]{0}', space=sflag, size = 0x4, scoped, tag = 'scoped memory for tpu_custom_call.1']
  #allocation5 [shape = 'u8[512]{0}', space=smem, size = 0x200, scoped, tag = 'prefetched SMEM operand 0']
  #allocation8 [shape = 's32[]', space=sflag, size = 0x4, offset = 0, fixed_abs, tag = 'sflag constant byte address 0x0 - dummy sync flag']
  %s0 = inlined_call_operand.hbm [shape: s32[3], index: 0, kind: input, shape index: {}]
  %s1 = inlined_call_operand.hbm [shape: f32[3,10,16,256], index: 1, kind: input, shape index: {}]
  %s2 = inlined_call_operand.hbm [shape: f32[3,8,8,8], index: 2, kind: output, shape index: {}]
  %s3 = sld [smem:[#allocation0]]
  $region10: #{tpu_custom_call.1} parent=0
    _
  %s5 = ssub.s32 1, %s3
  %s6 = scalar_select 0, %s5, %s3
  %8 = dma.hbm_to_smem %s0, 16, [#allocation5], [#allocation4]
  %9 = dma.done [#allocation4], 16
  %10 = sfence
  $region1: #{tpu_custom_call.1} parent=0
    #allocation6 [shape = 'u8[98304]{0}', space=vmem, size = 0x18000, scoped, tag = 'output window, operand 0, single buffered']
    #allocation7 [shape = 's32[1]{0}', space=sflag, size = 0x4, scoped, tag = 'scoped memory for tpu_custom_call.1']
    %11 = vsyncpa [#allocation7], 0
    %s12 = sld [smem:[#allocation5]]
    %s13 = sld [smem:[#allocation5 + $0x1]]
    %s14 = sld [smem:[#allocation5 + $0x2]]
    %s15 = smul.u32 %s12, 4
    %s16 = smul.addr %s15, 128
    %s17 = scalar_lea.hbm %s1, %s16
    %s19 = sshll.u32 [#allocation2], 4
    %s20 = int_to_ptr.vmem [resolvable:$true] %s19
    %22 = dma.hbm_to_vmem [thread:$0]  %s17, 12288, %s20, [#allocation3], 5120, 4096, 256
    %s23 = ssub.s32 16, %s13
    %p24 = scmp.lt.s32.totalorder %s23, 0
    %s25 = ssub.s32 0, %s23
    %s26 = scalar_select %p24, %s25, %s23
    %s27 = sand.u32 %s26, 15
    %s28 = ssub.s32 0, %s27
    %s29 = scalar_select %p24, %s28, %s27
    %s30 = ssub.s32 256, %s14
    %p31 = scmp.lt.s32.totalorder %s30, 0
    %s32 = ssub.s32 0, %s30
    %s33 = scalar_select %p31, %s32, %s30
    %s34 = sand.u32 %s33, 255
    %s35 = ssub.s32 0, %s34
    %s36 = scalar_select %p31, %s35, %s34
    %s37 = smul.u32 8, 3
    %s38 = smul.u32 %s37, 8
    %s39 = smul.u32 %s38, 2
    %s40 = smul.u32 %s39, 2
    %s41 = sshll.u32 %s40, 4
    %42 = dma.done [#allocation3], %s41
    %v43 = vld [vmem:[#allocation2] sm:$0xff]
    %v44 = vld [vmem:[#allocation2 + $0x8] sm:$0xff]
    %v45 = vld [vmem:[#allocation2 + $0x10] sm:$0xff]
    %v46 = vld [vmem:[#allocation2 + $0x18] sm:$0xff]
    %s47 = sand.u32 %s29, 15
    %s48 = sand.u32 %s47, 7
    %s49 = sshrl.u32 %s47, 3
    %s50 = ssub.s32 8, %s48
    %v51 = vstv %s50
    %v52 = vrot.slane %v43, %v51
    %v53 = vstv %s50
    %v54 = vrot.slane %v44, %v53
    %v55 = vstv %s50
    %v56 = vrot.slane %v45, %v55
    %v57 = vstv %s50
    %v58 = vrot.slane %v46, %v57
    %v59 = vstv %s48
    %v60 = vlaneseq
    %v61 = vshrl.u32 %v60, 7
    %vm62 = vcmp.lt.s32.totalorder %v61, %v59
    %v63 = vsel %vm62, %v52, %v56
    %v64 = vsel %vm62, %v54, %v58
    %v65 = vsel %vm62, %v56, %v52
    %v66 = vsel %vm62, %v58, %v54
    %s67 = sand.u32 %s49, 1
    %v68 = vstv %s67
    %vm69 = vcmp.ne.s32.totalorder %v68, 0
    %v70 = vsel %vm69, %v63, %v65
    %v71 = vsel %vm69, %v64, %v66
    %s72 = sand.u32 %s36, 255
    %s73 = sand.u32 %s72, 127
    %s74 = sshrl.u32 %s72, 7
    %75 = vrot.lane.b32.xlu0 %v70, %s73
    %v76 = vpop.permute.xlu0 %75
    %77 = vrot.lane.b32.xlu0 %v71, %s73
    %v78 = vpop.permute.xlu0 %77
    %v79 = vstv %s73
    %v80 = vlaneseq
    %v81 = vand.u32 %v80, 127
    %vm82 = vcmp.lt.s32.totalorder %v81, %v79
    %v83 = vsel %vm82, %v76, %v78
    %v84 = vsel %vm82, %v78, %v76
    %s85 = sand.u32 %s74, 1
    %v86 = vstv %s85
    %vm87 = vcmp.ne.s32.totalorder %v86, 0
    %v88 = vsel %vm87, %v83, %v84
    %vm89 = vcmask 64512
    %90 = vst.msk [vmem:[#allocation6] sm:$0xff] %vm89, %v88
    %s91 = scalar_lea.vmem [#allocation2], 32
    %v92 = vld [vmem:[%s91] sm:$0xff]
    %v93 = vld [vmem:[%s91 + $0x8] sm:$0xff]
    %v94 = vld [vmem:[%s91 + $0x10] sm:$0xff]
    %v95 = vld [vmem:[%s91 + $0x18] sm:$0xff]
    %v96 = vstv %s50
    %v97 = vrot.slane %v92, %v96
    %v98 = vstv %s50
    %v99 = vrot.slane %v93, %v98
    %v100 = vstv %s50
    %v101 = vrot.slane %v94, %v100
    %v102 = vstv %s50
    %v103 = vrot.slane %v95, %v102
    %v104 = vsel %vm62, %v97, %v101
    %v105 = vsel %vm62, %v99, %v103
    %v106 = vsel %vm62, %v101, %v97
    %v107 = vsel %vm62, %v103, %v99
    %v108 = vsel %vm69, %v104, %v106
    %v109 = vsel %vm69, %v105, %v107
    %110 = vrot.lane.b32.xlu0 %v108, %s73
    %v111 = vpop.permute.xlu0 %110
    %112 = vrot.lane.b32.xlu0 %v109, %s73
    %v113 = vpop.permute.xlu0 %112
    %v114 = vsel %vm82, %v111, %v113
    %v115 = vsel %vm82, %v113, %v111
    %v116 = vsel %vm87, %v114, %v115
    %s117 = scalar_lea.vmem [#allocation6], 8
    %118 = vst.msk [vmem:[%s117] sm:$0xff] %vm89, %v116
    %s119 = scalar_lea.vmem [#allocation2], 64
    %v120 = vld [vmem:[%s119] sm:$0xff]
    %v121 = vld [vmem:[%s119 + $0x8] sm:$0xff]
    %v122 = vld [vmem:[%s119 + $0x10] sm:$0xff]
    %v123 = vld [vmem:[%s119 + $0x18] sm:$0xff]
    %v124 = vstv %s50
    %v125 = vrot.slane %v120, %v124
    %v126 = vstv %s50
    %v127 = vrot.slane %v121, %v126
    %v128 = vstv %s50
    %v129 = vrot.slane %v122, %v128
    %v130 = vstv %s50
    %v131 = vrot.slane %v123, %v130
    %v132 = vsel %vm62, %v125, %v129
    %v133 = vsel %vm62, %v127, %v131
    %v134 = vsel %vm62, %v129, %v125
    %v135 = vsel %vm62, %v131, %v127
    %v136 = vsel %vm69, %v132, %v134
    %v137 = vsel %vm69, %v133, %v135
    %138 = vrot.lane.b32.xlu0 %v136, %s73
    %v139 = vpop.permute.xlu0 %138
    %140 = vrot.lane.b32.xlu0 %v137, %s73
    %v141 = vpop.permute.xlu0 %140
    %v142 = vsel %vm82, %v139, %v141
    %v143 = vsel %vm82, %v141, %v139
    %v144 = vsel %vm87, %v142, %v143
    %s145 = scalar_lea.vmem [#allocation6], 16
    %146 = vst.msk [vmem:[%s145] sm:$0xff] %vm89, %v144
    %s147 = scalar_lea.vmem [#allocation2], 96
    %v148 = vld [vmem:[%s147] sm:$0xff]
    %v149 = vld [vmem:[%s147 + $0x8] sm:$0xff]
    %v150 = vld [vmem:[%s147 + $0x10] sm:$0xff]
    %v151 = vld [vmem:[%s147 + $0x18] sm:$0xff]
    %v152 = vstv %s50
    %v153 = vrot.slane %v148, %v152
    %v154 = vstv %s50
    %v155 = vrot.slane %v149, %v154
    %v156 = vstv %s50
    %v157 = vrot.slane %v150, %v156
    %v158 = vstv %s50
    %v159 = vrot.slane %v151, %v158
    %v160 = vsel %vm62, %v153, %v157
    %v161 = vsel %vm62, %v155, %v159
    %v162 = vsel %vm62, %v157, %v153
    %v163 = vsel %vm62, %v159, %v155
    %v164 = vsel %vm69, %v160, %v162
    %v165 = vsel %vm69, %v161, %v163
    %166 = vrot.lane.b32.xlu0 %v164, %s73
    %v167 = vpop.permute.xlu0 %166
    %168 = vrot.lane.b32.xlu0 %v165, %s73
    %v169 = vpop.permute.xlu0 %168
    %v170 = vsel %vm82, %v167, %v169
    %v171 = vsel %vm82, %v169, %v167
    %v172 = vsel %vm87, %v170, %v171
    %s173 = scalar_lea.vmem [#allocation6], 24
    %174 = vst.msk [vmem:[%s173] sm:$0xff] %vm89, %v172
    %s175 = scalar_lea.vmem [#allocation2], 128
    %v176 = vld [vmem:[%s175] sm:$0xff]
    %v177 = vld [vmem:[%s175 + $0x8] sm:$0xff]
    %v178 = vld [vmem:[%s175 + $0x10] sm:$0xff]
    %v179 = vld [vmem:[%s175 + $0x18] sm:$0xff]
    %v180 = vstv %s50
    %v181 = vrot.slane %v176, %v180
    %v182 = vstv %s50
    %v183 = vrot.slane %v177, %v182
    %v184 = vstv %s50
    %v185 = vrot.slane %v178, %v184
    %v186 = vstv %s50
    %v187 = vrot.slane %v179, %v186
    %v188 = vsel %vm62, %v181, %v185
    %v189 = vsel %vm62, %v183, %v187
    %v190 = vsel %vm62, %v185, %v181
    %v191 = vsel %vm62, %v187, %v183
    %v192 = vsel %vm69, %v188, %v190
    %v193 = vsel %vm69, %v189, %v191
    %194 = vrot.lane.b32.xlu0 %v192, %s73
    %v195 = vpop.permute.xlu0 %194
    %196 = vrot.lane.b32.xlu0 %v193, %s73
    %v197 = vpop.permute.xlu0 %196
    %v198 = vsel %vm82, %v195, %v197
    %v199 = vsel %vm82, %v197, %v195
    %v200 = vsel %vm87, %v198, %v199
    %s201 = scalar_lea.vmem [#allocation6], 32
    %202 = vst.msk [vmem:[%s201] sm:$0xff] %vm89, %v200
    %s203 = scalar_lea.vmem [#allocation2], 160
    %v204 = vld [vmem:[%s203] sm:$0xff]
    %v205 = vld [vmem:[%s203 + $0x8] sm:$0xff]
    %v206 = vld [vmem:[%s203 + $0x10] sm:$0xff]
    %v207 = vld [vmem:[%s203 + $0x18] sm:$0xff]
    %v208 = vstv %s50
    %v209 = vrot.slane %v204, %v208
    %v210 = vstv %s50
    %v211 = vrot.slane %v205, %v210
    %v212 = vstv %s50
    %v213 = vrot.slane %v206, %v212
    %v214 = vstv %s50
    %v215 = vrot.slane %v207, %v214
    %v216 = vsel %vm62, %v209, %v213
    %v217 = vsel %vm62, %v211, %v215
    %v218 = vsel %vm62, %v213, %v209
    %v219 = vsel %vm62, %v215, %v211
    %v220 = vsel %vm69, %v216, %v218
    %v221 = vsel %vm69, %v217, %v219
    %222 = vrot.lane.b32.xlu0 %v220, %s73
    %v223 = vpop.permute.xlu0 %222
    %224 = vrot.lane.b32.xlu0 %v221, %s73
    %v225 = vpop.permute.xlu0 %224
    %v226 = vsel %vm82, %v223, %v225
    %v227 = vsel %vm82, %v225, %v223
    %v228 = vsel %vm87, %v226, %v227
    %s229 = scalar_lea.vmem [#allocation6], 40
    %230 = vst.msk [vmem:[%s229] sm:$0xff] %vm89, %v228
    %s231 = scalar_lea.vmem [#allocation2], 192
    %v232 = vld [vmem:[%s231] sm:$0xff]
    %v233 = vld [vmem:[%s231 + $0x8] sm:$0xff]
    %v234 = vld [vmem:[%s231 + $0x10] sm:$0xff]
    %v235 = vld [vmem:[%s231 + $0x18] sm:$0xff]
    %v236 = vstv %s50
    %v237 = vrot.slane %v232, %v236
    %v238 = vstv %s50
    %v239 = vrot.slane %v233, %v238
    %v240 = vstv %s50
    %v241 = vrot.slane %v234, %v240
    %v242 = vstv %s50
    %v243 = vrot.slane %v235, %v242
    %v244 = vsel %vm62, %v237, %v241
    %v245 = vsel %vm62, %v239, %v243
    %v246 = vsel %vm62, %v241, %v237
    %v247 = vsel %vm62, %v243, %v239
    %v248 = vsel %vm69, %v244, %v246
    %v249 = vsel %vm69, %v245, %v247
    %250 = vrot.lane.b32.xlu0 %v248, %s73
    %v251 = vpop.permute.xlu0 %250
    %252 = vrot.lane.b32.xlu0 %v249, %s73
    %v253 = vpop.permute.xlu0 %252
    %v254 = vsel %vm82, %v251, %v253
    %v255 = vsel %vm82, %v253, %v251
    %v256 = vsel %vm87, %v254, %v255
    %s257 = scalar_lea.vmem [#allocation6], 48
    %258 = vst.msk [vmem:[%s257] sm:$0xff] %vm89, %v256
    %s259 = scalar_lea.vmem [#allocation2], 224
    %v260 = vld [vmem:[%s259] sm:$0xff]
    %v261 = vld [vmem:[%s259 + $0x8] sm:$0xff]
    %v262 = vld [vmem:[%s259 + $0x10] sm:$0xff]
    %v263 = vld [vmem:[%s259 + $0x18] sm:$0xff]
    %v264 = vstv %s50
    %v265 = vrot.slane %v260, %v264
    %v266 = vstv %s50
    %v267 = vrot.slane %v261, %v266
    %v268 = vstv %s50
    %v269 = vrot.slane %v262, %v268
    %v270 = vstv %s50
    %v271 = vrot.slane %v263, %v270
    %v272 = vsel %vm62, %v265, %v269
    %v273 = vsel %vm62, %v267, %v271
    %v274 = vsel %vm62, %v269, %v265
    %v275 = vsel %vm62, %v271, %v267
    %v276 = vsel %vm69, %v272, %v274
    %v277 = vsel %vm69, %v273, %v275
    %278 = vrot.lane.b32.xlu0 %v276, %s73
    %v279 = vpop.permute.xlu0 %278
    %280 = vrot.lane.b32.xlu0 %v277, %s73
    %v281 = vpop.permute.xlu0 %280
    %v282 = vsel %vm82, %v279, %v281
    %v283 = vsel %vm82, %v281, %v279
    %v284 = vsel %vm87, %v282, %v283
    %s285 = scalar_lea.vmem [#allocation6], 56
    %286 = vst.msk [vmem:[%s285] sm:$0xff] %vm89, %v284
    %s287 = scalar_lea.vmem [#allocation2], 256
    %v288 = vld [vmem:[%s287] sm:$0xff]
    %v289 = vld [vmem:[%s287 + $0x8] sm:$0xff]
    %v290 = vld [vmem:[%s287 + $0x10] sm:$0xff]
    %v291 = vld [vmem:[%s287 + $0x18] sm:$0xff]
    %v292 = vstv %s50
    %v293 = vrot.slane %v288, %v292
    %v294 = vstv %s50
    %v295 = vrot.slane %v289, %v294
    %v296 = vstv %s50
    %v297 = vrot.slane %v290, %v296
    %v298 = vstv %s50
    %v299 = vrot.slane %v291, %v298
    %v300 = vsel %vm62, %v293, %v297
    %v301 = vsel %vm62, %v295, %v299
    %v302 = vsel %vm62, %v297, %v293
    %v303 = vsel %vm62, %v299, %v295
    %v304 = vsel %vm69, %v300, %v302
    %v305 = vsel %vm69, %v301, %v303
    %306 = vrot.lane.b32.xlu0 %v304, %s73
    %v307 = vpop.permute.xlu0 %306
    %308 = vrot.lane.b32.xlu0 %v305, %s73
    %v309 = vpop.permute.xlu0 %308
    %v310 = vsel %vm82, %v307, %v309
    %v311 = vsel %vm82, %v309, %v307
    %v312 = vsel %vm87, %v310, %v311
    %s313 = scalar_lea.vmem [#allocation6], 64
    %314 = vst.msk [vmem:[%s313] sm:$0xff] %vm89, %v312
    %s315 = scalar_lea.vmem [#allocation2], 288
    %v316 = vld [vmem:[%s315] sm:$0xff]
    %v317 = vld [vmem:[%s315 + $0x8] sm:$0xff]
    %v318 = vld [vmem:[%s315 + $0x10] sm:$0xff]
    %v319 = vld [vmem:[%s315 + $0x18] sm:$0xff]
    %v320 = vstv %s50
    %v321 = vrot.slane %v316, %v320
    %v322 = vstv %s50
    %v323 = vrot.slane %v317, %v322
    %v324 = vstv %s50
    %v325 = vrot.slane %v318, %v324
    %v326 = vstv %s50
    %v327 = vrot.slane %v319, %v326
    %v328 = vsel %vm62, %v321, %v325
    %v329 = vsel %vm62, %v323, %v327
    %v330 = vsel %vm62, %v325, %v321
    %v331 = vsel %vm62, %v327, %v323
    %v332 = vsel %vm69, %v328, %v330
    %v333 = vsel %vm69, %v329, %v331
    %334 = vrot.lane.b32.xlu0 %v332, %s73
    %v335 = vpop.permute.xlu0 %334
    %336 = vrot.lane.b32.xlu0 %v333, %s73
    %v337 = vpop.permute.xlu0 %336
    %v338 = vsel %vm82, %v335, %v337
    %v339 = vsel %vm82, %v337, %v335
    %v340 = vsel %vm87, %v338, %v339
    %s341 = scalar_lea.vmem [#allocation6], 72
    %342 = vst.msk [vmem:[%s341] sm:$0xff] %vm89, %v340
    %s343 = scalar_lea.vmem [#allocation2], 320
    %v344 = vld [vmem:[%s343] sm:$0xff]
    %v345 = vld [vmem:[%s343 + $0x8] sm:$0xff]
    %v346 = vld [vmem:[%s343 + $0x10] sm:$0xff]
    %v347 = vld [vmem:[%s343 + $0x18] sm:$0xff]
    %v348 = vstv %s50
    %v349 = vrot.slane %v344, %v348
    %v350 = vstv %s50
    %v351 = vrot.slane %v345, %v350
    %v352 = vstv %s50
    %v353 = vrot.slane %v346, %v352
    %v354 = vstv %s50
    %v355 = vrot.slane %v347, %v354
    %v356 = vsel %vm62, %v349, %v353
    %v357 = vsel %vm62, %v351, %v355
    %v358 = vsel %vm62, %v353, %v349
    %v359 = vsel %vm62, %v355, %v351
    %v360 = vsel %vm69, %v356, %v358
    %v361 = vsel %vm69, %v357, %v359
    %362 = vrot.lane.b32.xlu0 %v360, %s73
    %v363 = vpop.permute.xlu0 %362
    %364 = vrot.lane.b32.xlu0 %v361, %s73
    %v365 = vpop.permute.xlu0 %364
    %v366 = vsel %vm82, %v363, %v365
    %v367 = vsel %vm82, %v365, %v363
    %v368 = vsel %vm87, %v366, %v367
    %s369 = scalar_lea.vmem [#allocation6], 80
    %370 = vst.msk [vmem:[%s369] sm:$0xff] %vm89, %v368
    %s371 = scalar_lea.vmem [#allocation2], 352
    %v372 = vld [vmem:[%s371] sm:$0xff]
    %v373 = vld [vmem:[%s371 + $0x8] sm:$0xff]
    %v374 = vld [vmem:[%s371 + $0x10] sm:$0xff]
    %v375 = vld [vmem:[%s371 + $0x18] sm:$0xff]
    %v376 = vstv %s50
    %v377 = vrot.slane %v372, %v376
    %v378 = vstv %s50
    %v379 = vrot.slane %v373, %v378
    %v380 = vstv %s50
    %v381 = vrot.slane %v374, %v380
    %v382 = vstv %s50
    %v383 = vrot.slane %v375, %v382
    %v384 = vsel %vm62, %v377, %v381
    %v385 = vsel %vm62, %v379, %v383
    %v386 = vsel %vm62, %v381, %v377
    %v387 = vsel %vm62, %v383, %v379
    %v388 = vsel %vm69, %v384, %v386
    %v389 = vsel %vm69, %v385, %v387
    %390 = vrot.lane.b32.xlu0 %v388, %s73
    %v391 = vpop.permute.xlu0 %390
    %392 = vrot.lane.b32.xlu0 %v389, %s73
    %v393 = vpop.permute.xlu0 %392
    %v394 = vsel %vm82, %v391, %v393
    %v395 = vsel %vm82, %v393, %v391
    %v396 = vsel %vm87, %v394, %v395
    %s397 = scalar_lea.vmem [#allocation6], 88
    %398 = vst.msk [vmem:[%s397] sm:$0xff] %vm89, %v396
    %s399 = scalar_lea.vmem [#allocation2], 384
    %v400 = vld [vmem:[%s399] sm:$0xff]
    %v401 = vld [vmem:[%s399 + $0x8] sm:$0xff]
    %v402 = vld [vmem:[%s399 + $0x10] sm:$0xff]
    %v403 = vld [vmem:[%s399 + $0x18] sm:$0xff]
    %v404 = vstv %s50
    %v405 = vrot.slane %v400, %v404
    %v406 = vstv %s50
    %v407 = vrot.slane %v401, %v406
    %v408 = vstv %s50
    %v409 = vrot.slane %v402, %v408
    %v410 = vstv %s50
    %v411 = vrot.slane %v403, %v410
    %v412 = vsel %vm62, %v405, %v409
    %v413 = vsel %vm62, %v407, %v411
    %v414 = vsel %vm62, %v409, %v405
    %v415 = vsel %vm62, %v411, %v407
    %v416 = vsel %vm69, %v412, %v414
    %v417 = vsel %vm69, %v413, %v415
    %418 = vrot.lane.b32.xlu0 %v416, %s73
    %v419 = vpop.permute.xlu0 %418
    %420 = vrot.lane.b32.xlu0 %v417, %s73
    %v421 = vpop.permute.xlu0 %420
    %v422 = vsel %vm82, %v419, %v421
    %v423 = vsel %vm82, %v421, %v419
    %v424 = vsel %vm87, %v422, %v423
    %s425 = scalar_lea.vmem [#allocation6], 96
    %426 = vst.msk [vmem:[%s425] sm:$0xff] %vm89, %v424
    %s427 = scalar_lea.vmem [#allocation2], 416
    %v428 = vld [vmem:[%s427] sm:$0xff]
    %v429 = vld [vmem:[%s427 + $0x8] sm:$0xff]
    %v430 = vld [vmem:[%s427 + $0x10] sm:$0xff]
    %v431 = vld [vmem:[%s427 + $0x18] sm:$0xff]
    %v432 = vstv %s50
    %v433 = vrot.slane %v428, %v432
    %v434 = vstv %s50
    %v435 = vrot.slane %v429, %v434
    %v436 = vstv %s50
    %v437 = vrot.slane %v430, %v436
    %v438 = vstv %s50
    %v439 = vrot.slane %v431, %v438
    %v440 = vsel %vm62, %v433, %v437
    %v441 = vsel %vm62, %v435, %v439
    %v442 = vsel %vm62, %v437, %v433
    %v443 = vsel %vm62, %v439, %v435
    %v444 = vsel %vm69, %v440, %v442
    %v445 = vsel %vm69, %v441, %v443
    %446 = vrot.lane.b32.xlu0 %v444, %s73
    %v447 = vpop.permute.xlu0 %446
    %448 = vrot.lane.b32.xlu0 %v445, %s73
    %v449 = vpop.permute.xlu0 %448
    %v450 = vsel %vm82, %v447, %v449
    %v451 = vsel %vm82, %v449, %v447
    %v452 = vsel %vm87, %v450, %v451
    %s453 = scalar_lea.vmem [#allocation6], 104
    %454 = vst.msk [vmem:[%s453] sm:$0xff] %vm89, %v452
    %s455 = scalar_lea.vmem [#allocation2], 448
    %v456 = vld [vmem:[%s455] sm:$0xff]
    %v457 = vld [vmem:[%s455 + $0x8] sm:$0xff]
    %v458 = vld [vmem:[%s455 + $0x10] sm:$0xff]
    %v459 = vld [vmem:[%s455 + $0x18] sm:$0xff]
    %v460 = vstv %s50
    %v461 = vrot.slane %v456, %v460
    %v462 = vstv %s50
    %v463 = vrot.slane %v457, %v462
    %v464 = vstv %s50
    %v465 = vrot.slane %v458, %v464
    %v466 = vstv %s50
    %v467 = vrot.slane %v459, %v466
    %v468 = vsel %vm62, %v461, %v465
    %v469 = vsel %vm62, %v463, %v467
    %v470 = vsel %vm62, %v465, %v461
    %v471 = vsel %vm62, %v467, %v463
    %v472 = vsel %vm69, %v468, %v470
    %v473 = vsel %vm69, %v469, %v471
    %474 = vrot.lane.b32.xlu0 %v472, %s73
    %v475 = vpop.permute.xlu0 %474
    %476 = vrot.lane.b32.xlu0 %v473, %s73
    %v477 = vpop.permute.xlu0 %476
    %v478 = vsel %vm82, %v475, %v477
    %v479 = vsel %vm82, %v477, %v475
    %v480 = vsel %vm87, %v478, %v479
    %s481 = scalar_lea.vmem [#allocation6], 112
    %482 = vst.msk [vmem:[%s481] sm:$0xff] %vm89, %v480
    %s483 = scalar_lea.vmem [#allocation2], 480
    %v484 = vld [vmem:[%s483] sm:$0xff]
    %v485 = vld [vmem:[%s483 + $0x8] sm:$0xff]
    %v486 = vld [vmem:[%s483 + $0x10] sm:$0xff]
    %v487 = vld [vmem:[%s483 + $0x18] sm:$0xff]
    %v488 = vstv %s50
    %v489 = vrot.slane %v484, %v488
    %v490 = vstv %s50
    %v491 = vrot.slane %v485, %v490
    %v492 = vstv %s50
    %v493 = vrot.slane %v486, %v492
    %v494 = vstv %s50
    %v495 = vrot.slane %v487, %v494
    %v496 = vsel %vm62, %v489, %v493
    %v497 = vsel %vm62, %v491, %v495
    %v498 = vsel %vm62, %v493, %v489
    %v499 = vsel %vm62, %v495, %v491
    %v500 = vsel %vm69, %v496, %v498
    %v501 = vsel %vm69, %v497, %v499
    %502 = vrot.lane.b32.xlu0 %v500, %s73
    %v503 = vpop.permute.xlu0 %502
    %504 = vrot.lane.b32.xlu0 %v501, %s73
    %v505 = vpop.permute.xlu0 %504
    %v506 = vsel %vm82, %v503, %v505
    %v507 = vsel %vm82, %v505, %v503
    %v508 = vsel %vm87, %v506, %v507
    %s509 = scalar_lea.vmem [#allocation6], 120
    %510 = vst.msk [vmem:[%s509] sm:$0xff] %vm89, %v508
    %s511 = scalar_lea.vmem [#allocation2], 512
    %v512 = vld [vmem:[%s511] sm:$0xff]
    %v513 = vld [vmem:[%s511 + $0x8] sm:$0xff]
    %v514 = vld [vmem:[%s511 + $0x10] sm:$0xff]
    %v515 = vld [vmem:[%s511 + $0x18] sm:$0xff]
    %v516 = vstv %s50
    %v517 = vrot.slane %v512, %v516
    %v518 = vstv %s50
    %v519 = vrot.slane %v513, %v518
    %v520 = vstv %s50
    %v521 = vrot.slane %v514, %v520
    %v522 = vstv %s50
    %v523 = vrot.slane %v515, %v522
    %v524 = vsel %vm62, %v517, %v521
    %v525 = vsel %vm62, %v519, %v523
    %v526 = vsel %vm62, %v521, %v517
    %v527 = vsel %vm62, %v523, %v519
    %v528 = vsel %vm69, %v524, %v526
    %v529 = vsel %vm69, %v525, %v527
    %530 = vrot.lane.b32.xlu0 %v528, %s73
    %v531 = vpop.permute.xlu0 %530
    %532 = vrot.lane.b32.xlu0 %v529, %s73
    %v533 = vpop.permute.xlu0 %532
    %v534 = vsel %vm82, %v531, %v533
    %v535 = vsel %vm82, %v533, %v531
    %v536 = vsel %vm87, %v534, %v535
    %s537 = scalar_lea.vmem [#allocation6], 128
    %538 = vst.msk [vmem:[%s537] sm:$0xff] %vm89, %v536
    %s539 = scalar_lea.vmem [#allocation2], 544
    %v540 = vld [vmem:[%s539] sm:$0xff]
    %v541 = vld [vmem:[%s539 + $0x8] sm:$0xff]
    %v542 = vld [vmem:[%s539 + $0x10] sm:$0xff]
    %v543 = vld [vmem:[%s539 + $0x18] sm:$0xff]
    %v544 = vstv %s50
    %v545 = vrot.slane %v540, %v544
    %v546 = vstv %s50
    %v547 = vrot.slane %v541, %v546
    %v548 = vstv %s50
    %v549 = vrot.slane %v542, %v548
    %v550 = vstv %s50
    %v551 = vrot.slane %v543, %v550
    %v552 = vsel %vm62, %v545, %v549
    %v553 = vsel %vm62, %v547, %v551
    %v554 = vsel %vm62, %v549, %v545
    %v555 = vsel %vm62, %v551, %v547
    %v556 = vsel %vm69, %v552, %v554
    %v557 = vsel %vm69, %v553, %v555
    %558 = vrot.lane.b32.xlu0 %v556, %s73
    %v559 = vpop.permute.xlu0 %558
    %560 = vrot.lane.b32.xlu0 %v557, %s73
    %v561 = vpop.permute.xlu0 %560
    %v562 = vsel %vm82, %v559, %v561
    %v563 = vsel %vm82, %v561, %v559
    %v564 = vsel %vm87, %v562, %v563
    %s565 = scalar_lea.vmem [#allocation6], 136
    %566 = vst.msk [vmem:[%s565] sm:$0xff] %vm89, %v564
    %s567 = scalar_lea.vmem [#allocation2], 576
    %v568 = vld [vmem:[%s567] sm:$0xff]
    %v569 = vld [vmem:[%s567 + $0x8] sm:$0xff]
    %v570 = vld [vmem:[%s567 + $0x10] sm:$0xff]
    %v571 = vld [vmem:[%s567 + $0x18] sm:$0xff]
    %v572 = vstv %s50
    %v573 = vrot.slane %v568, %v572
    %v574 = vstv %s50
    %v575 = vrot.slane %v569, %v574
    %v576 = vstv %s50
    %v577 = vrot.slane %v570, %v576
    %v578 = vstv %s50
    %v579 = vrot.slane %v571, %v578
    %v580 = vsel %vm62, %v573, %v577
    %v581 = vsel %vm62, %v575, %v579
    %v582 = vsel %vm62, %v577, %v573
    %v583 = vsel %vm62, %v579, %v575
    %v584 = vsel %vm69, %v580, %v582
    %v585 = vsel %vm69, %v581, %v583
    %586 = vrot.lane.b32.xlu0 %v584, %s73
    %v587 = vpop.permute.xlu0 %586
    %588 = vrot.lane.b32.xlu0 %v585, %s73
    %v589 = vpop.permute.xlu0 %588
    %v590 = vsel %vm82, %v587, %v589
    %v591 = vsel %vm82, %v589, %v587
    %v592 = vsel %vm87, %v590, %v591
    %s593 = scalar_lea.vmem [#allocation6], 144
    %594 = vst.msk [vmem:[%s593] sm:$0xff] %vm89, %v592
    %s595 = scalar_lea.vmem [#allocation2], 608
    %v596 = vld [vmem:[%s595] sm:$0xff]
    %v597 = vld [vmem:[%s595 + $0x8] sm:$0xff]
    %v598 = vld [vmem:[%s595 + $0x10] sm:$0xff]
    %v599 = vld [vmem:[%s595 + $0x18] sm:$0xff]
    %v600 = vstv %s50
    %v601 = vrot.slane %v596, %v600
    %v602 = vstv %s50
    %v603 = vrot.slane %v597, %v602
    %v604 = vstv %s50
    %v605 = vrot.slane %v598, %v604
    %v606 = vstv %s50
    %v607 = vrot.slane %v599, %v606
    %v608 = vsel %vm62, %v601, %v605
    %v609 = vsel %vm62, %v603, %v607
    %v610 = vsel %vm62, %v605, %v601
    %v611 = vsel %vm62, %v607, %v603
    %v612 = vsel %vm69, %v608, %v610
    %v613 = vsel %vm69, %v609, %v611
    %614 = vrot.lane.b32.xlu0 %v612, %s73
    %v615 = vpop.permute.xlu0 %614
    %616 = vrot.lane.b32.xlu0 %v613, %s73
    %v617 = vpop.permute.xlu0 %616
    %v618 = vsel %vm82, %v615, %v617
    %v619 = vsel %vm82, %v617, %v615
    %v620 = vsel %vm87, %v618, %v619
    %s621 = scalar_lea.vmem [#allocation6], 152
    %622 = vst.msk [vmem:[%s621] sm:$0xff] %vm89, %v620
    %s623 = scalar_lea.vmem [#allocation2], 640
    %v624 = vld [vmem:[%s623] sm:$0xff]
    %v625 = vld [vmem:[%s623 + $0x8] sm:$0xff]
    %v626 = vld [vmem:[%s623 + $0x10] sm:$0xff]
    %v627 = vld [vmem:[%s623 + $0x18] sm:$0xff]
    %v628 = vstv %s50
    %v629 = vrot.slane %v624, %v628
    %v630 = vstv %s50
    %v631 = vrot.slane %v625, %v630
    %v632 = vstv %s50
    %v633 = vrot.slane %v626, %v632
    %v634 = vstv %s50
    %v635 = vrot.slane %v627, %v634
    %v636 = vsel %vm62, %v629, %v633
    %v637 = vsel %vm62, %v631, %v635
    %v638 = vsel %vm62, %v633, %v629
    %v639 = vsel %vm62, %v635, %v631
    %v640 = vsel %vm69, %v636, %v638
    %v641 = vsel %vm69, %v637, %v639
    %642 = vrot.lane.b32.xlu0 %v640, %s73
    %v643 = vpop.permute.xlu0 %642
    %644 = vrot.lane.b32.xlu0 %v641, %s73
    %v645 = vpop.permute.xlu0 %644
    %v646 = vsel %vm82, %v643, %v645
    %v647 = vsel %vm82, %v645, %v643
    %v648 = vsel %vm87, %v646, %v647
    %s649 = scalar_lea.vmem [#allocation6], 160
    %650 = vst.msk [vmem:[%s649] sm:$0xff] %vm89, %v648
    %s651 = scalar_lea.vmem [#allocation2], 672
    %v652 = vld [vmem:[%s651] sm:$0xff]
    %v653 = vld [vmem:[%s651 + $0x8] sm:$0xff]
    %v654 = vld [vmem:[%s651 + $0x10] sm:$0xff]
    %v655 = vld [vmem:[%s651 + $0x18] sm:$0xff]
    %v656 = vstv %s50
    %v657 = vrot.slane %v652, %v656
    %v658 = vstv %s50
    %v659 = vrot.slane %v653, %v658
    %v660 = vstv %s50
    %v661 = vrot.slane %v654, %v660
    %v662 = vstv %s50
    %v663 = vrot.slane %v655, %v662
    %v664 = vsel %vm62, %v657, %v661
    %v665 = vsel %vm62, %v659, %v663
    %v666 = vsel %vm62, %v661, %v657
    %v667 = vsel %vm62, %v663, %v659
    %v668 = vsel %vm69, %v664, %v666
    %v669 = vsel %vm69, %v665, %v667
    %670 = vrot.lane.b32.xlu0 %v668, %s73
    %v671 = vpop.permute.xlu0 %670
    %672 = vrot.lane.b32.xlu0 %v669, %s73
    %v673 = vpop.permute.xlu0 %672
    %v674 = vsel %vm82, %v671, %v673
    %v675 = vsel %vm82, %v673, %v671
    %v676 = vsel %vm87, %v674, %v675
    %s677 = scalar_lea.vmem [#allocation6], 168
    %678 = vst.msk [vmem:[%s677] sm:$0xff] %vm89, %v676
    %s679 = scalar_lea.vmem [#allocation2], 704
    %v680 = vld [vmem:[%s679] sm:$0xff]
    %v681 = vld [vmem:[%s679 + $0x8] sm:$0xff]
    %v682 = vld [vmem:[%s679 + $0x10] sm:$0xff]
    %v683 = vld [vmem:[%s679 + $0x18] sm:$0xff]
    %v684 = vstv %s50
    %v685 = vrot.slane %v680, %v684
    %v686 = vstv %s50
    %v687 = vrot.slane %v681, %v686
    %v688 = vstv %s50
    %v689 = vrot.slane %v682, %v688
    %v690 = vstv %s50
    %v691 = vrot.slane %v683, %v690
    %v692 = vsel %vm62, %v685, %v689
    %v693 = vsel %vm62, %v687, %v691
    %v694 = vsel %vm62, %v689, %v685
    %v695 = vsel %vm62, %v691, %v687
    %v696 = vsel %vm69, %v692, %v694
    %v697 = vsel %vm69, %v693, %v695
    %698 = vrot.lane.b32.xlu0 %v696, %s73
    %v699 = vpop.permute.xlu0 %698
    %700 = vrot.lane.b32.xlu0 %v697, %s73
    %v701 = vpop.permute.xlu0 %700
    %v702 = vsel %vm82, %v699, %v701
    %v703 = vsel %vm82, %v701, %v699
    %v704 = vsel %vm87, %v702, %v703
    %s705 = scalar_lea.vmem [#allocation6], 176
    %706 = vst.msk [vmem:[%s705] sm:$0xff] %vm89, %v704
    %s707 = scalar_lea.vmem [#allocation2], 736
    %v708 = vld [vmem:[%s707] sm:$0xff]
    %v709 = vld [vmem:[%s707 + $0x8] sm:$0xff]
    %v710 = vld [vmem:[%s707 + $0x10] sm:$0xff]
    %v711 = vld [vmem:[%s707 + $0x18] sm:$0xff]
    %v712 = vstv %s50
    %v713 = vrot.slane %v708, %v712
    %v714 = vstv %s50
    %v715 = vrot.slane %v709, %v714
    %v716 = vstv %s50
    %v717 = vrot.slane %v710, %v716
    %v718 = vstv %s50
    %v719 = vrot.slane %v711, %v718
    %v720 = vsel %vm62, %v713, %v717
    %v721 = vsel %vm62, %v715, %v719
    %v722 = vsel %vm62, %v717, %v713
    %v723 = vsel %vm62, %v719, %v715
    %v724 = vsel %vm69, %v720, %v722
    %v725 = vsel %vm69, %v721, %v723
    %726 = vrot.lane.b32.xlu0 %v724, %s73
    %v727 = vpop.permute.xlu0 %726
    %728 = vrot.lane.b32.xlu0 %v725, %s73
    %v729 = vpop.permute.xlu0 %728
    %v730 = vsel %vm82, %v727, %v729
    %v731 = vsel %vm82, %v729, %v727
    %v732 = vsel %vm87, %v730, %v731
    %s733 = scalar_lea.vmem [#allocation6], 184
    %734 = vst.msk [vmem:[%s733] sm:$0xff] %vm89, %v732
    // Predicated region
    $region2: #{tpu_custom_call.1} parent=1 // pred_check
      _
    $region3: #{tpu_custom_call.1} parent=1 // pred_check_branch
      %736 = sbr.rel (0) target = $region5
    $region4: #{tpu_custom_call.1} parent=1 // pred_region
      %s738 = ssub.s32 3072, 3072
      %739 = vsyncadd [#allocation7], %s738
      %s740 = sshll.u32 [#allocation6], 4
      %s741 = int_to_ptr.vmem [resolvable:$true] %s740
      %746 = dma.vmem_to_hbm [thread:$0]  %s741, 3072, %s2, [#allocation7], 128, 128, 8
    $region5: #{tpu_custom_call.1} parent=1 // pred_fallthru
      _
    // Predicated region
    $region6: #{tpu_custom_call.1} parent=1 // pred_check
      _
    $region7: #{tpu_custom_call.1} parent=1 // pred_check_branch
      %748 = sbr.rel (0) target = $region9
    $region8: #{tpu_custom_call.1} parent=1 // pred_region
      %749 = dma.done [#allocation7], 3072
    $region9: #{tpu_custom_call.1} parent=1 // pred_fallthru
      _
    %750 = vsyncpa [#allocation7], 1
  %751 = vsyncmov [#allocation3]
  %s752 = vpop.sfrf %751
  %p753 = scmp.eq.s32.totalorder %s752, 0
  %p754 = pneg %p753
  %756 = shalt.err (%p754)

</llo_original>
